<compile_context>
chip_gen: v7x
topology: tpu7x:2x2x1
jax: 0.10.0
libtpu: 0.0.40
codegen_flags: <defaults>
</compile_context>

<pallas_src>
import functools

import jax
import jax.numpy as jnp
from jax import lax
from jax.experimental import pallas as pl
from jax.experimental.pallas import tpu as pltpu


def _mlp_kernel(x_ref, t_ref, b1_ref, w2_ref, b2_ref, w3_ref, b3_ref, out_ref):
    TB, L = x_ref.shape            # (batch tile, max_length)
    LV, H = t_ref.shape            # (max_length * vocab, hidden)
    V = LV // L

    ids = x_ref[...]                                         # (TB, L) int32
    col = lax.broadcasted_iota(jnp.int32, (TB, LV), 1)       # lane-dense column index

    # one_hot[b, l*V + v] = (x[b, l] == v); built band-by-band with compares + OR,
    # no reshape / gather / relayout.  L is small and static, so the loop unrolls.
    # NOTE: out-of-range token ids produce an all-zero band (zero embedding) instead
    # of raising like torch.nn.Embedding would.
    hit = col == ids[:, 0:1]
    for l in range(1, L):
        hit = jnp.logical_or(hit, col == ids[:, l:l + 1] + l * V)
    one_hot = hit.astype(jnp.bfloat16)

    # Fused embedding + Linear1: (TB, L*V) @ (L*V, H), bf16 inputs, f32 accumulate.
    h1 = jnp.dot(one_hot, t_ref[...], preferred_element_type=jnp.float32)
    h1 = jnp.maximum(h1 + b1_ref[...], 0.0)

    h2 = jnp.dot(h1.astype(jnp.bfloat16), w2_ref[...],
                 preferred_element_type=jnp.float32)
    h2 = jnp.maximum(h2 + b2_ref[...], 0.0)

    out = jnp.dot(h2.astype(jnp.bfloat16), w3_ref[...],
                  preferred_element_type=jnp.float32)
    out_ref[...] = out + b3_ref[...]                         # (TB, L*V) f32, lane-dense


@functools.partial(jax.jit, static_argnames=("max_length", "vocab_size", "block_b"))
def predict_past_tense(x, emb, w1, b1, w2, b2, w3, b3, *,
                       max_length, vocab_size, block_b=128):
    B, L = x.shape
    assert L == max_length
    V = vocab_size
    E = emb.shape[1]
    H = w1.shape[1]
    LV = L * V

    # Fold the embedding table into the first Linear (done once, in f32):
    #   T[l*V + v, :] = emb[v, :] @ w1[l*E:(l+1)*E, :]
    T = jnp.einsum("ve,leh->lvh", emb, w1.reshape(L, E, H),
                   precision=lax.Precision.HIGHEST,
                   preferred_element_type=jnp.float32).reshape(LV, H)

    # bf16 MXU operands (accumulation stays f32 inside the kernel).
    T_bf = T.astype(jnp.bfloat16)
    w2_bf = w2.astype(jnp.bfloat16)
    w3_bf = w3.astype(jnp.bfloat16)

    # Pad batch up to a multiple of the batch tile (token 0 is a valid id).
    tb = block_b
    Bp = pl.cdiv(B, tb) * tb
    if Bp != B:
        x = jnp.pad(x, ((0, Bp - B), (0, 0)))

    const = lambda i: (0, 0)   # weights / biases stay resident across the batch grid

    out_flat = pl.pallas_call(
        _mlp_kernel,
        out_shape=jax.ShapeDtypeStruct((Bp, LV), jnp.float32),
        grid_spec=pltpu.PrefetchScalarGridSpec(
            num_scalar_prefetch=0,
            grid=(Bp // tb,),
            in_specs=[
                pl.BlockSpec((tb, L), lambda i: (i, 0)),   # token ids (int32)
                pl.BlockSpec((LV, H), const),              # fused emb+w1 (bf16)
                pl.BlockSpec((1, H), const),               # b1 (f32)
                pl.BlockSpec((H, H), const),               # w2 (bf16)
                pl.BlockSpec((1, H), const),               # b2 (f32)
                pl.BlockSpec((H, LV), const),              # w3 (bf16)
                pl.BlockSpec((1, LV), const),              # b3 (f32)
            ],
            out_specs=pl.BlockSpec((tb, LV), lambda i: (i, 0)),
        ),
        compiler_params=pltpu.CompilerParams(
            dimension_semantics=("parallel",)),            # free 2-TC split on v7x
    )(x, T_bf, b1, w2_bf, b2, w3_bf, b3)

    # Reshape outside the kernel (keeps in-kernel stores unmasked full-lane vst).
    return out_flat[:B].reshape(B, max_length, vocab_size)


def init_params(key, vocab_size, embedding_dim, hidden_dim, max_length):
    """Deterministic init mimicking PyTorch defaults (Embedding ~ N(0,1),
    Linear ~ U(-1/sqrt(fan_in), 1/sqrt(fan_in))). Weights stored (in, out)."""
    k_emb, k1, kb1, k2, kb2, k3, kb3 = jax.random.split(key, 7)
    in1 = max_length * embedding_dim
    out3 = max_length * vocab_size

    emb = jax.random.normal(k_emb, (vocab_size, embedding_dim), jnp.float32)

    def lin(kw, kb, fan_in, fan_out):
        bound = 1.0 / jnp.sqrt(jnp.float32(fan_in))
        w = jax.random.uniform(kw, (fan_in, fan_out), jnp.float32, -bound, bound)
        b = jax.random.uniform(kb, (1, fan_out), jnp.float32, -bound, bound)
        return w, b

    w1, b1 = lin(k1, kb1, in1, hidden_dim)
    w2, b2 = lin(k2, kb2, hidden_dim, hidden_dim)
    w3, b3 = lin(k3, kb3, hidden_dim, out3)
    return emb, w1, b1, w2, b2, w3, b3


if __name__ == "__main__":
    vocab_size = 32
    embedding_dim = 16
    hidden_dim = 32
    max_length = 8
    batch = 256          # per perf feedback: >=128 rows per MXU pass (2 batch tiles)

    key = jax.random.PRNGKey(0)
    k_params, k_x = jax.random.split(key)
    emb, w1, b1, w2, b2, w3, b3 = init_params(
        k_params, vocab_size, embedding_dim, hidden_dim, max_length)

    x = jax.random.randint(k_x, (batch, max_length), 0, vocab_size, jnp.int32)

    out = predict_past_tense(x, emb, w1, b1, w2, b2, w3, b3,
                             max_length=max_length, vocab_size=vocab_size)
    jax.block_until_ready(out)
    assert out.shape == (batch, max_length, vocab_size)

    # f32 reference of the torch forward pass.
    ref_flat = emb[x].reshape(batch, -1)
    ref_h1 = jnp.maximum(
        jnp.dot(ref_flat, w1, precision=lax.Precision.HIGHEST) + b1, 0.0)
    ref_h2 = jnp.maximum(
        jnp.dot(ref_h1, w2, precision=lax.Precision.HIGHEST) + b2, 0.0)
    ref = (jnp.dot(ref_h2, w3, precision=lax.Precision.HIGHEST) + b3).reshape(
        batch, max_length, vocab_size)

    # bf16 matmul inputs (f32 accumulation) => tolerance relaxed vs pure-f32 reference.
    assert jnp.allclose(out, ref, atol=2e-2, rtol=2e-2), "mismatch vs reference"

    print("KERNEL_OK")
</pallas_src>

<mosaic_0001>
module attributes {stable_mosaic.version = 11 : i64} {
  func.func @_mlp_kernel(%arg0: i32, %arg1: memref<128x8xi32, #tpu.memory_space<vmem>>, %arg2: memref<256x32xbf16, #tpu.memory_space<vmem>>, %arg3: memref<1x32xf32, #tpu.memory_space<vmem>>, %arg4: memref<32x32xbf16, #tpu.memory_space<vmem>>, %arg5: memref<1x32xf32, #tpu.memory_space<vmem>>, %arg6: memref<32x256xbf16, #tpu.memory_space<vmem>>, %arg7: memref<1x256xf32, #tpu.memory_space<vmem>>, %arg8: memref<128x256xf32, #tpu.memory_space<vmem>>) attributes {dimension_semantics = [#tpu.dimension_semantics<parallel>], iteration_bounds = array<i64: 2>, scalar_prefetch = 0 : i64, scratch_operands = 0 : i64, tpu.core_type = #tpu.core_type<tc>, window_params = [{transform_indices = @transform_0, window_bounds = array<i64: 128, 8>}, {pipeline_mode = #tpu.pipeline_mode<synchronous>, transform_indices = @transform_1, window_bounds = array<i64: 256, 32>}, {pipeline_mode = #tpu.pipeline_mode<synchronous>, transform_indices = @transform_2, window_bounds = array<i64: 1, 32>}, {pipeline_mode = #tpu.pipeline_mode<synchronous>, transform_indices = @transform_3, window_bounds = array<i64: 32, 32>}, {pipeline_mode = #tpu.pipeline_mode<synchronous>, transform_indices = @transform_4, window_bounds = array<i64: 1, 32>}, {pipeline_mode = #tpu.pipeline_mode<synchronous>, transform_indices = @transform_5, window_bounds = array<i64: 32, 256>}, {pipeline_mode = #tpu.pipeline_mode<synchronous>, transform_indices = @transform_6, window_bounds = array<i64: 1, 256>}, {transform_indices = @transform_7, window_bounds = array<i64: 128, 256>}]} {
    %c0 = arith.constant 0 : index
    %c0_0 = arith.constant 0 : index
    %0 = vector.load %arg1[%c0, %c0_0] : memref<128x8xi32, #tpu.memory_space<vmem>>, vector<128x8xi32>
    %1 = tpu.iota {dimensions = array<i32: 1>} : vector<128x256xi32>
    %2 = vector.extract_strided_slice %0 {offsets = [0, 0], sizes = [128, 1], strides = [1, 1]} : vector<128x8xi32> to vector<128x1xi32>
    %3 = vector.broadcast %2 : vector<128x1xi32> to vector<128x256xi32>
    %4 = arith.cmpi eq, %1, %3 : vector<128x256xi32>
    %5 = vector.extract_strided_slice %0 {offsets = [0, 1], sizes = [128, 1], strides = [1, 1]} : vector<128x8xi32> to vector<128x1xi32>
    %c32_i32 = arith.constant 32 : i32
    %6 = vector.broadcast %c32_i32 : i32 to vector<128x1xi32>
    %7 = arith.addi %5, %6 : vector<128x1xi32>
    %8 = vector.broadcast %7 : vector<128x1xi32> to vector<128x256xi32>
    %9 = arith.cmpi eq, %1, %8 : vector<128x256xi32>
    %10 = arith.ori %4, %9 : vector<128x256xi1>
    %11 = vector.extract_strided_slice %0 {offsets = [0, 2], sizes = [128, 1], strides = [1, 1]} : vector<128x8xi32> to vector<128x1xi32>
    %c64_i32 = arith.constant 64 : i32
    %12 = vector.broadcast %c64_i32 : i32 to vector<128x1xi32>
    %13 = arith.addi %11, %12 : vector<128x1xi32>
    %14 = vector.broadcast %13 : vector<128x1xi32> to vector<128x256xi32>
    %15 = arith.cmpi eq, %1, %14 : vector<128x256xi32>
    %16 = arith.ori %10, %15 : vector<128x256xi1>
    %17 = vector.extract_strided_slice %0 {offsets = [0, 3], sizes = [128, 1], strides = [1, 1]} : vector<128x8xi32> to vector<128x1xi32>
    %c96_i32 = arith.constant 96 : i32
    %18 = vector.broadcast %c96_i32 : i32 to vector<128x1xi32>
    %19 = arith.addi %17, %18 : vector<128x1xi32>
    %20 = vector.broadcast %19 : vector<128x1xi32> to vector<128x256xi32>
    %21 = arith.cmpi eq, %1, %20 : vector<128x256xi32>
    %22 = arith.ori %16, %21 : vector<128x256xi1>
    %23 = vector.extract_strided_slice %0 {offsets = [0, 4], sizes = [128, 1], strides = [1, 1]} : vector<128x8xi32> to vector<128x1xi32>
    %c128_i32 = arith.constant 128 : i32
    %24 = vector.broadcast %c128_i32 : i32 to vector<128x1xi32>
    %25 = arith.addi %23, %24 : vector<128x1xi32>
    %26 = vector.broadcast %25 : vector<128x1xi32> to vector<128x256xi32>
    %27 = arith.cmpi eq, %1, %26 : vector<128x256xi32>
    %28 = arith.ori %22, %27 : vector<128x256xi1>
    %29 = vector.extract_strided_slice %0 {offsets = [0, 5], sizes = [128, 1], strides = [1, 1]} : vector<128x8xi32> to vector<128x1xi32>
    %c160_i32 = arith.constant 160 : i32
    %30 = vector.broadcast %c160_i32 : i32 to vector<128x1xi32>
    %31 = arith.addi %29, %30 : vector<128x1xi32>
    %32 = vector.broadcast %31 : vector<128x1xi32> to vector<128x256xi32>
    %33 = arith.cmpi eq, %1, %32 : vector<128x256xi32>
    %34 = arith.ori %28, %33 : vector<128x256xi1>
    %35 = vector.extract_strided_slice %0 {offsets = [0, 6], sizes = [128, 1], strides = [1, 1]} : vector<128x8xi32> to vector<128x1xi32>
    %c192_i32 = arith.constant 192 : i32
    %36 = vector.broadcast %c192_i32 : i32 to vector<128x1xi32>
    %37 = arith.addi %35, %36 : vector<128x1xi32>
    %38 = vector.broadcast %37 : vector<128x1xi32> to vector<128x256xi32>
    %39 = arith.cmpi eq, %1, %38 : vector<128x256xi32>
    %40 = arith.ori %34, %39 : vector<128x256xi1>
    %41 = vector.extract_strided_slice %0 {offsets = [0, 7], sizes = [128, 1], strides = [1, 1]} : vector<128x8xi32> to vector<128x1xi32>
    %c224_i32 = arith.constant 224 : i32
    %42 = vector.broadcast %c224_i32 : i32 to vector<128x1xi32>
    %43 = arith.addi %41, %42 : vector<128x1xi32>
    %44 = vector.broadcast %43 : vector<128x1xi32> to vector<128x256xi32>
    %45 = arith.cmpi eq, %1, %44 : vector<128x256xi32>
    %46 = arith.ori %40, %45 : vector<128x256xi1>
    %47 = arith.extui %46 : vector<128x256xi1> to vector<128x256xi32>
    %48 = arith.sitofp %47 : vector<128x256xi32> to vector<128x256xf32>
    %49 = arith.truncf %48 : vector<128x256xf32> to vector<128x256xbf16>
    %c0_1 = arith.constant 0 : index
    %c0_2 = arith.constant 0 : index
    %50 = vector.load %arg2[%c0_1, %c0_2] : memref<256x32xbf16, #tpu.memory_space<vmem>>, vector<256x32xbf16>
    %cst = arith.constant dense<0.000000e+00> : vector<128x32xf32>
    %51 = tpu.matmul %49, %50, %cst {dimension_numbers = #tpu.dot_dimension_numbers<[1], [0], [0], [1], [0, 0, 1, 1], [], []>} : vector<128x256xbf16>, vector<256x32xbf16>, vector<128x32xf32> -> vector<128x32xf32>
    %c0_3 = arith.constant 0 : index
    %c0_4 = arith.constant 0 : index
    %52 = vector.load %arg3[%c0_3, %c0_4] : memref<1x32xf32, #tpu.memory_space<vmem>>, vector<1x32xf32>
    %53 = vector.broadcast %52 : vector<1x32xf32> to vector<128x32xf32>
    %54 = arith.addf %51, %53 : vector<128x32xf32>
    %cst_5 = arith.constant 0.000000e+00 : f32
    %55 = vector.broadcast %cst_5 : f32 to vector<128x32xf32>
    %56 = arith.maximumf %54, %55 : vector<128x32xf32>
    %57 = arith.truncf %56 : vector<128x32xf32> to vector<128x32xbf16>
    %c0_6 = arith.constant 0 : index
    %c0_7 = arith.constant 0 : index
    %58 = vector.load %arg4[%c0_6, %c0_7] : memref<32x32xbf16, #tpu.memory_space<vmem>>, vector<32x32xbf16>
    %cst_8 = arith.constant dense<0.000000e+00> : vector<128x32xf32>
    %59 = tpu.matmul %57, %58, %cst_8 {dimension_numbers = #tpu.dot_dimension_numbers<[1], [0], [0], [1], [0, 0, 1, 1], [], []>} : vector<128x32xbf16>, vector<32x32xbf16>, vector<128x32xf32> -> vector<128x32xf32>
    %c0_9 = arith.constant 0 : index
    %c0_10 = arith.constant 0 : index
    %60 = vector.load %arg5[%c0_9, %c0_10] : memref<1x32xf32, #tpu.memory_space<vmem>>, vector<1x32xf32>
    %61 = vector.broadcast %60 : vector<1x32xf32> to vector<128x32xf32>
    %62 = arith.addf %59, %61 : vector<128x32xf32>
    %cst_11 = arith.constant 0.000000e+00 : f32
    %63 = vector.broadcast %cst_11 : f32 to vector<128x32xf32>
    %64 = arith.maximumf %62, %63 : vector<128x32xf32>
    %65 = arith.truncf %64 : vector<128x32xf32> to vector<128x32xbf16>
    %c0_12 = arith.constant 0 : index
    %c0_13 = arith.constant 0 : index
    %66 = vector.load %arg6[%c0_12, %c0_13] : memref<32x256xbf16, #tpu.memory_space<vmem>>, vector<32x256xbf16>
    %cst_14 = arith.constant dense<0.000000e+00> : vector<128x256xf32>
    %67 = tpu.matmul %65, %66, %cst_14 {dimension_numbers = #tpu.dot_dimension_numbers<[1], [0], [0], [1], [0, 0, 1, 1], [], []>} : vector<128x32xbf16>, vector<32x256xbf16>, vector<128x256xf32> -> vector<128x256xf32>
    %c0_15 = arith.constant 0 : index
    %c0_16 = arith.constant 0 : index
    %68 = vector.load %arg7[%c0_15, %c0_16] : memref<1x256xf32, #tpu.memory_space<vmem>>, vector<1x256xf32>
    %69 = vector.broadcast %68 : vector<1x256xf32> to vector<128x256xf32>
    %70 = arith.addf %67, %69 : vector<128x256xf32>
    %c0_17 = arith.constant 0 : index
    %c0_18 = arith.constant 0 : index
    %71 = vector.load %arg8[%c0_17, %c0_18] : memref<128x256xf32, #tpu.memory_space<vmem>>, vector<128x256xf32>
    tpu.vector_store %arg8[%c0_17, %c0_18], %70 {strides = array<i32>} : memref<128x256xf32, #tpu.memory_space<vmem>>, vector<128x256xf32>,
    return
  }
  func.func @transform_0(%arg0: i32) -> (i32, i32) {
    %c0_i32 = arith.constant 0 : i32
    %c0_i32_0 = arith.constant 0 : i32
    return %arg0, %c0_i32 : i32, i32
  }
  func.func @transform_1(%arg0: i32) -> (i32, i32) {
    %c0_i32 = arith.constant 0 : i32
    %c0_i32_0 = arith.constant 0 : i32
    %c0_i32_1 = arith.constant 0 : i32
    return %c0_i32, %c0_i32_0 : i32, i32
  }
  func.func @transform_2(%arg0: i32) -> (i32, i32) {
    %c0_i32 = arith.constant 0 : i32
    %c0_i32_0 = arith.constant 0 : i32
    %c0_i32_1 = arith.constant 0 : i32
    return %c0_i32, %c0_i32_0 : i32, i32
  }
  func.func @transform_3(%arg0: i32) -> (i32, i32) {
    %c0_i32 = arith.constant 0 : i32
    %c0_i32_0 = arith.constant 0 : i32
    %c0_i32_1 = arith.constant 0 : i32
    return %c0_i32, %c0_i32_0 : i32, i32
  }
  func.func @transform_4(%arg0: i32) -> (i32, i32) {
    %c0_i32 = arith.constant 0 : i32
    %c0_i32_0 = arith.constant 0 : i32
    %c0_i32_1 = arith.constant 0 : i32
    return %c0_i32, %c0_i32_0 : i32, i32
  }
  func.func @transform_5(%arg0: i32) -> (i32, i32) {
    %c0_i32 = arith.constant 0 : i32
    %c0_i32_0 = arith.constant 0 : i32
    %c0_i32_1 = arith.constant 0 : i32
    return %c0_i32, %c0_i32_0 : i32, i32
  }
  func.func @transform_6(%arg0: i32) -> (i32, i32) {
    %c0_i32 = arith.constant 0 : i32
    %c0_i32_0 = arith.constant 0 : i32
    %c0_i32_1 = arith.constant 0 : i32
    return %c0_i32, %c0_i32_0 : i32, i32
  }
  func.func @transform_7(%arg0: i32) -> (i32, i32) {
    %c0_i32 = arith.constant 0 : i32
    %c0_i32_0 = arith.constant 0 : i32
    return %arg0, %c0_i32 : i32, i32
  }
}

</mosaic_0001>

<llo_original>
// kernel: predict_past_tense.1
$region0: #{predict_past_tense.1}
  #allocation0 [shape = 'u32[]', space=smem, size = 0x4, offset = 0x4, fixed_abs, tag = 'smem constant byte address 0x4 - core index']
  #allocation1 [shape = 'u32[144,128]{1,0:T(1,128)}', space=vmem, size = 0x12000, scoped, tag = 'internal scratch']
  %s0 = inlined_call_operand.vmem [shape: s32[256,8], index: 0, kind: input, shape index: {}]
  %s1 = inlined_call_operand.vmem [shape: bf16[256,32], index: 1, kind: input, shape index: {}]
  %s2 = inlined_call_operand.vmem [shape: f32[1,32], index: 2, kind: input, shape index: {}]
  %s3 = inlined_call_operand.vmem [shape: bf16[32,32], index: 3, kind: input, shape index: {}]
  %s4 = inlined_call_operand.vmem [shape: f32[1,32], index: 4, kind: input, shape index: {}]
  %s5 = inlined_call_operand.vmem [shape: bf16[32,256], index: 5, kind: input, shape index: {}]
  %s6 = inlined_call_operand.vmem [shape: f32[1,256], index: 6, kind: input, shape index: {}]
  %s7 = inlined_call_operand.vmem [shape: f32[256,256], index: 7, kind: output, shape index: {}]
  %s8 = sld [smem:[#allocation0]]
  $region61: #{predict_past_tense.1} parent=0
    _
  %s10 = ssub.s32 1, %s8
  %s11 = scalar_select 0, %s10, %s8
  loop: start=0, step=1, limit=4
  $region2: #{predict_past_tense.1} parent=0 // loop_pre_header
    _
  $region3: #{predict_past_tense.1} parent=0 // loop_header
    %s13 = sphi 0, %s17
    %p14 = scmp.ge.s32.totalorder %s13, 4
    %s23 = sphi 0, %s25
    %s26 = sphi 0, %s23
    %s27 = sphi 0, %s26
    %s43 = sphi 0, %s27
    %s47 = sphi 0, %s47
    %s49 = sphi 0, %s47
    %s50 = sphi 0, %s49
    %s64 = sphi 0, %s50
    %s68 = sphi 0, %s68
    %s70 = sphi 0, %s68
    %s71 = sphi 0, %s70
    %s85 = sphi 0, %s71
    %s89 = sphi 0, %s89
    %s91 = sphi 0, %s89
    %s92 = sphi 0, %s91
    %s106 = sphi 0, %s92
    %s110 = sphi 0, %s110
    %s112 = sphi 0, %s110
    %s113 = sphi 0, %s112
    %s127 = sphi 0, %s113
    %s131 = sphi 0, %s131
    %s133 = sphi 0, %s131
    %s134 = sphi 0, %s133
    %s148 = sphi 0, %s134
    %s152 = sphi 0, %s152
    %s154 = sphi 0, %s152
    %s155 = sphi 0, %s154
    %s169 = sphi 0, %s155
    %s175 = sphi 0, %s177
    %s178 = sphi 0, %s175
    %s179 = sphi 0, %s178
    %s195 = sphi 0, %s179
  $region4: #{predict_past_tense.1} parent=0 // loop_header_branch
    %16 = sbr.rel (%p14) target = $region8
  $region5: #{predict_past_tense.1} parent=0 // loop_body
    %s18 = ssub.s32 %s13, 1
    %s19 = ssub.s32 %s13, 2
    %s20 = sadd.s32 %s13, 1
    %s21 = ssub.s32 %s13, %s20
    %p22 = scmp.eq.s32.totalorder %s21, 0
    %s24 = sadd.s32 %s23, 1
    %s25 = scalar_select %p22, %s23, %s24
    %p28 = pneg %p22
    %p29 = scmp.eq.s32.totalorder %s13, 1
    %p30 = por %p28, %p29
    %p31 = scmp.ne.s32.totalorder %s23, %s26
    %p32 = scmp.eq.s32.totalorder %s13, 0
    %p33 = por %p31, %p32
    %p34 = scmp.ne.s32.totalorder %s23, %s26
    %p35 = scmp.eq.s32.totalorder %s18, 1
    %p36 = por %p34, %p35
    %p37 = scmp.ne.s32.totalorder %s26, %s27
    %p38 = scmp.eq.s32.totalorder %s18, 0
    %p39 = por %p37, %p38
    %p40 = scmp.ne.s32.totalorder %s26, %s27
    %p41 = scmp.eq.s32.totalorder %s19, 1
    %p42 = por %p40, %p41
    %p44 = scmp.ne.s32.totalorder %s27, %s43
    %p45 = scmp.eq.s32.totalorder %s19, 0
    %p46 = por %p44, %p45
    %s48 = sadd.s32 %s47, 1
    %p51 = scmp.eq.s32.totalorder %s13, 1
    %p52 = scmp.ne.s32.totalorder %s47, %s49
    %p53 = scmp.eq.s32.totalorder %s13, 0
    %p54 = por %p52, %p53
    %p55 = scmp.ne.s32.totalorder %s47, %s49
    %p56 = scmp.eq.s32.totalorder %s18, 1
    %p57 = por %p55, %p56
    %p58 = scmp.ne.s32.totalorder %s49, %s50
    %p59 = scmp.eq.s32.totalorder %s18, 0
    %p60 = por %p58, %p59
    %p61 = scmp.ne.s32.totalorder %s49, %s50
    %p62 = scmp.eq.s32.totalorder %s19, 1
    %p63 = por %p61, %p62
    %p65 = scmp.ne.s32.totalorder %s50, %s64
    %p66 = scmp.eq.s32.totalorder %s19, 0
    %p67 = por %p65, %p66
    %s69 = sadd.s32 %s68, 1
    %p72 = scmp.eq.s32.totalorder %s13, 1
    %p73 = scmp.ne.s32.totalorder %s68, %s70
    %p74 = scmp.eq.s32.totalorder %s13, 0
    %p75 = por %p73, %p74
    %p76 = scmp.ne.s32.totalorder %s68, %s70
    %p77 = scmp.eq.s32.totalorder %s18, 1
    %p78 = por %p76, %p77
    %p79 = scmp.ne.s32.totalorder %s70, %s71
    %p80 = scmp.eq.s32.totalorder %s18, 0
    %p81 = por %p79, %p80
    %p82 = scmp.ne.s32.totalorder %s70, %s71
    %p83 = scmp.eq.s32.totalorder %s19, 1
    %p84 = por %p82, %p83
    %p86 = scmp.ne.s32.totalorder %s71, %s85
    %p87 = scmp.eq.s32.totalorder %s19, 0
    %p88 = por %p86, %p87
    %s90 = sadd.s32 %s89, 1
    %p93 = scmp.eq.s32.totalorder %s13, 1
    %p94 = scmp.ne.s32.totalorder %s89, %s91
    %p95 = scmp.eq.s32.totalorder %s13, 0
    %p96 = por %p94, %p95
    %p97 = scmp.ne.s32.totalorder %s89, %s91
    %p98 = scmp.eq.s32.totalorder %s18, 1
    %p99 = por %p97, %p98
    %p100 = scmp.ne.s32.totalorder %s91, %s92
    %p101 = scmp.eq.s32.totalorder %s18, 0
    %p102 = por %p100, %p101
    %p103 = scmp.ne.s32.totalorder %s91, %s92
    %p104 = scmp.eq.s32.totalorder %s19, 1
    %p105 = por %p103, %p104
    %p107 = scmp.ne.s32.totalorder %s92, %s106
    %p108 = scmp.eq.s32.totalorder %s19, 0
    %p109 = por %p107, %p108
    %s111 = sadd.s32 %s110, 1
    %p114 = scmp.eq.s32.totalorder %s13, 1
    %p115 = scmp.ne.s32.totalorder %s110, %s112
    %p116 = scmp.eq.s32.totalorder %s13, 0
    %p117 = por %p115, %p116
    %p118 = scmp.ne.s32.totalorder %s110, %s112
    %p119 = scmp.eq.s32.totalorder %s18, 1
    %p120 = por %p118, %p119
    %p121 = scmp.ne.s32.totalorder %s112, %s113
    %p122 = scmp.eq.s32.totalorder %s18, 0
    %p123 = por %p121, %p122
    %p124 = scmp.ne.s32.totalorder %s112, %s113
    %p125 = scmp.eq.s32.totalorder %s19, 1
    %p126 = por %p124, %p125
    %p128 = scmp.ne.s32.totalorder %s113, %s127
    %p129 = scmp.eq.s32.totalorder %s19, 0
    %p130 = por %p128, %p129
    %s132 = sadd.s32 %s131, 1
    %p135 = scmp.eq.s32.totalorder %s13, 1
    %p136 = scmp.ne.s32.totalorder %s131, %s133
    %p137 = scmp.eq.s32.totalorder %s13, 0
    %p138 = por %p136, %p137
    %p139 = scmp.ne.s32.totalorder %s131, %s133
    %p140 = scmp.eq.s32.totalorder %s18, 1
    %p141 = por %p139, %p140
    %p142 = scmp.ne.s32.totalorder %s133, %s134
    %p143 = scmp.eq.s32.totalorder %s18, 0
    %p144 = por %p142, %p143
    %p145 = scmp.ne.s32.totalorder %s133, %s134
    %p146 = scmp.eq.s32.totalorder %s19, 1
    %p147 = por %p145, %p146
    %p149 = scmp.ne.s32.totalorder %s134, %s148
    %p150 = scmp.eq.s32.totalorder %s19, 0
    %p151 = por %p149, %p150
    %s153 = sadd.s32 %s152, 1
    %p156 = scmp.eq.s32.totalorder %s13, 1
    %p157 = scmp.ne.s32.totalorder %s152, %s154
    %p158 = scmp.eq.s32.totalorder %s13, 0
    %p159 = por %p157, %p158
    %p160 = scmp.ne.s32.totalorder %s152, %s154
    %p161 = scmp.eq.s32.totalorder %s18, 1
    %p162 = por %p160, %p161
    %p163 = scmp.ne.s32.totalorder %s154, %s155
    %p164 = scmp.eq.s32.totalorder %s18, 0
    %p165 = por %p163, %p164
    %p166 = scmp.ne.s32.totalorder %s154, %s155
    %p167 = scmp.eq.s32.totalorder %s19, 1
    %p168 = por %p166, %p167
    %p170 = scmp.ne.s32.totalorder %s155, %s169
    %p171 = scmp.eq.s32.totalorder %s19, 0
    %p172 = por %p170, %p171
    %s173 = ssub.s32 %s13, %s20
    %p174 = scmp.eq.s32.totalorder %s173, 0
    %s176 = sadd.s32 %s175, 1
    %s177 = scalar_select %p174, %s175, %s176
    %p180 = pneg %p174
    %p181 = scmp.eq.s32.totalorder %s13, 1
    %p182 = por %p180, %p181
    %p183 = scmp.ne.s32.totalorder %s175, %s178
    %p184 = scmp.eq.s32.totalorder %s13, 0
    %p185 = por %p183, %p184
    %p186 = scmp.ne.s32.totalorder %s175, %s178
    %p187 = scmp.eq.s32.totalorder %s18, 1
    %p188 = por %p186, %p187
    %p189 = scmp.ne.s32.totalorder %s178, %s179
    %p190 = scmp.eq.s32.totalorder %s18, 0
    %p191 = por %p189, %p190
    %p192 = scmp.ne.s32.totalorder %s178, %s179
    %p193 = scmp.eq.s32.totalorder %s19, 1
    %p194 = por %p192, %p193
    %p196 = scmp.ne.s32.totalorder %s179, %s195
    %p197 = scmp.eq.s32.totalorder %s19, 0
    %p198 = por %p196, %p197
    %p199 = scmp.le.s32.totalorder 1, %s13
    %p200 = scmp.lt.s32.totalorder %s13, 3
    %p201 = pnand %p199, %p200
    %p202 = pneg %p201
    // Predicated region
    $region9: #{predict_past_tense.1} parent=5 // pred_check
      _
    $region10: #{predict_past_tense.1} parent=5 // pred_check_branch
      %204 = sbr.rel (%p201) target = $region12
    $region11: #{predict_past_tense.1} parent=5 // pred_region
      %s205 = ssub.s32 %s13, 1
      // Predicated region
      $region13: #{predict_past_tense.1} parent=11 // pred_check
        %p206 = pneg %p60
      $region14: #{predict_past_tense.1} parent=11 // pred_check_branch
        %208 = sbr.rel (%p206) target = $region16
      $region15: #{predict_past_tense.1} parent=11 // pred_region
        _
      $region16: #{predict_past_tense.1} parent=11 // pred_fallthru
        _
      // Predicated region
      $region17: #{predict_past_tense.1} parent=11 // pred_check
        %p209 = pneg %p81
      $region18: #{predict_past_tense.1} parent=11 // pred_check_branch
        %211 = sbr.rel (%p209) target = $region20
      $region19: #{predict_past_tense.1} parent=11 // pred_region
        _
      $region20: #{predict_past_tense.1} parent=11 // pred_fallthru
        _
      // Predicated region
      $region21: #{predict_past_tense.1} parent=11 // pred_check
        %p212 = pneg %p102
      $region22: #{predict_past_tense.1} parent=11 // pred_check_branch
        %214 = sbr.rel (%p212) target = $region24
      $region23: #{predict_past_tense.1} parent=11 // pred_region
        _
      $region24: #{predict_past_tense.1} parent=11 // pred_fallthru
        _
      // Predicated region
      $region25: #{predict_past_tense.1} parent=11 // pred_check
        %p215 = pneg %p123
      $region26: #{predict_past_tense.1} parent=11 // pred_check_branch
        %217 = sbr.rel (%p215) target = $region28
      $region27: #{predict_past_tense.1} parent=11 // pred_region
        _
      $region28: #{predict_past_tense.1} parent=11 // pred_fallthru
        _
      // Predicated region
      $region29: #{predict_past_tense.1} parent=11 // pred_check
        %p218 = pneg %p144
      $region30: #{predict_past_tense.1} parent=11 // pred_check_branch
        %220 = sbr.rel (%p218) target = $region32
      $region31: #{predict_past_tense.1} parent=11 // pred_region
        _
      $region32: #{predict_past_tense.1} parent=11 // pred_fallthru
        _
      // Predicated region
      $region33: #{predict_past_tense.1} parent=11 // pred_check
        %p221 = pneg %p165
      $region34: #{predict_past_tense.1} parent=11 // pred_check_branch
        %223 = sbr.rel (%p221) target = $region36
      $region35: #{predict_past_tense.1} parent=11 // pred_region
        _
      $region36: #{predict_past_tense.1} parent=11 // pred_fallthru
        _
    $region12: #{predict_past_tense.1} parent=5 // pred_fallthru
      _
    %p224 = scmp.lt.s32.totalorder %s13, 2
    // Predicated region
    $region37: #{predict_past_tense.1} parent=5 // pred_check
      %p225 = pneg %p224
    $region38: #{predict_past_tense.1} parent=5 // pred_check_branch
      %227 = sbr.rel (%p225) target = $region40
    $region39: #{predict_past_tense.1} parent=5 // pred_region
      // Predicated region
      $region41: #{predict_past_tense.1} parent=39 // pred_check
        %p228 = pneg %p33
      $region42: #{predict_past_tense.1} parent=39 // pred_check_branch
        %230 = sbr.rel (%p228) target = $region44
      $region43: #{predict_past_tense.1} parent=39 // pred_region
        %s231 = smul.u32 16, %s13
        %p232 = scmp.lt.s32.totalorder %s231, 31
        %s233 = scalar_select %p232, %s231, 31
        %s234 = smul.addr %s233, 8
        %s235 = scalar_lea.vmem %s0, %s234
        %s236 = smul.u32 16, %s13
      $region44: #{predict_past_tense.1} parent=39 // pred_fallthru
        _
    $region40: #{predict_past_tense.1} parent=5 // pred_fallthru
      _
    %p237 = scmp.le.s32.totalorder 1, %s13
    %p238 = scmp.lt.s32.totalorder %s13, 3
    %p239 = pnand %p237, %p238
    %p240 = pneg %p239
    // Predicated region
    $region45: #{predict_past_tense.1} parent=5 // pred_check
      _
    $region46: #{predict_past_tense.1} parent=5 // pred_check_branch
      %242 = sbr.rel (%p239) target = $region48
    $region47: #{predict_past_tense.1} parent=5 // pred_region
      %s243 = ssub.s32 %s13, 1
      %s244 = smul.u32 16, %s18
      %p245 = scmp.lt.s32.totalorder %s244, 31
      %s246 = scalar_select %p245, %s244, 31
      %s247 = smul.addr %s246, 8
      %s248 = scalar_lea.vmem %s0, %s247
      %p249 = pneg %p39
      %p250 = pneg %p36
      %p251 = pneg %p60
      %p252 = pneg %p57
      %p253 = pneg %p81
      %p254 = pneg %p78
      %p255 = pneg %p102
      %p256 = pneg %p99
      %p257 = pneg %p123
      %p258 = pneg %p120
      %p259 = pneg %p144
      %p260 = pneg %p141
      %p261 = pneg %p165
      %p262 = pneg %p162
      %p263 = pneg %p191
      %p264 = pneg %p188
      %s265 = smul.u32 16, %s18
      %p266 = scmp.lt.s32.totalorder %s265, 31
      %s267 = scalar_select %p266, %s265, 31
      %s268 = smul.addr %s267, 2
      %s269 = smul.addr %s268, 8
      %s270 = scalar_lea.vmem %s7, %s269
      %s271 = smul.u32 16, %s18
      %p272 = scmp.lt.s32.totalorder %s271, 31
      %s273 = scalar_select %p272, %s271, 31
      %s274 = smul.addr %s273, 8
      %s275 = scalar_lea.vmem %s0, %s274
      %s276 = smul.u32 16, %s18
      %s277 = smul.u32 16, %s18
      %p278 = scmp.lt.s32.totalorder %s277, 31
      %s279 = scalar_select %p278, %s277, 31
      %s280 = smul.addr %s279, 2
      %s281 = smul.addr %s280, 8
      %s282 = scalar_lea.vmem %s7, %s281
      %s283 = smul.u32 16, %s18
      %v285 = vld [vmem:[%s275] sm:$0xff]
      %v286 = vld [vmem:[%s275 + $0x8] sm:$0xff]
      %v287 = vld [vmem:[%s275 + $0x10] sm:$0xff]
      %v288 = vld [vmem:[%s275 + $0x18] sm:$0xff]
      %v289 = vld [vmem:[%s275 + $0x20] sm:$0xff]
      %v290 = vld [vmem:[%s275 + $0x28] sm:$0xff]
      %v291 = vld [vmem:[%s275 + $0x30] sm:$0xff]
      %v292 = vld [vmem:[%s275 + $0x38] sm:$0xff]
      %v293 = vld [vmem:[%s275 + $0x40] sm:$0xff]
      %v294 = vld [vmem:[%s275 + $0x48] sm:$0xff]
      %v295 = vld [vmem:[%s275 + $0x50] sm:$0xff]
      %v296 = vld [vmem:[%s275 + $0x58] sm:$0xff]
      %v297 = vld [vmem:[%s275 + $0x60] sm:$0xff]
      %v298 = vld [vmem:[%s275 + $0x68] sm:$0xff]
      %v299 = vld [vmem:[%s275 + $0x70] sm:$0xff]
      %v300 = vld [vmem:[%s275 + $0x78] sm:$0xff]
      %v301 = vlaneseq
      %v302 = vand.u32 %v301, 127
      %v303 = vadd.s32 %v302, 128
      %304 = vset.pattern.permute.xlu0 0
      %305 = vperm.xlu0 %304, %v285
      %v306 = vpop.permute.xlu0 %305
      %307 = vset.pattern.permute.xlu0 0
      %308 = vperm.xlu0 %307, %v286
      %v309 = vpop.permute.xlu0 %308
      %310 = vset.pattern.permute.xlu0 0
      %311 = vperm.xlu0 %310, %v287
      %v312 = vpop.permute.xlu0 %311
      %313 = vset.pattern.permute.xlu0 0
      %314 = vperm.xlu0 %313, %v288
      %v315 = vpop.permute.xlu0 %314
      %316 = vset.pattern.permute.xlu0 0
      %317 = vperm.xlu0 %316, %v289
      %v318 = vpop.permute.xlu0 %317
      %319 = vset.pattern.permute.xlu0 0
      %320 = vperm.xlu0 %319, %v290
      %v321 = vpop.permute.xlu0 %320
      %322 = vset.pattern.permute.xlu0 0
      %323 = vperm.xlu0 %322, %v291
      %v324 = vpop.permute.xlu0 %323
      %325 = vset.pattern.permute.xlu0 0
      %326 = vperm.xlu0 %325, %v292
      %v327 = vpop.permute.xlu0 %326
      %328 = vset.pattern.permute.xlu0 0
      %329 = vperm.xlu0 %328, %v293
      %v330 = vpop.permute.xlu0 %329
      %331 = vset.pattern.permute.xlu0 0
      %332 = vperm.xlu0 %331, %v294
      %v333 = vpop.permute.xlu0 %332
      %334 = vset.pattern.permute.xlu0 0
      %335 = vperm.xlu0 %334, %v295
      %v336 = vpop.permute.xlu0 %335
      %337 = vset.pattern.permute.xlu0 0
      %338 = vperm.xlu0 %337, %v296
      %v339 = vpop.permute.xlu0 %338
      %340 = vset.pattern.permute.xlu0 0
      %341 = vperm.xlu0 %340, %v297
      %v342 = vpop.permute.xlu0 %341
      %343 = vset.pattern.permute.xlu0 0
      %344 = vperm.xlu0 %343, %v298
      %v345 = vpop.permute.xlu0 %344
      %346 = vset.pattern.permute.xlu0 0
      %347 = vperm.xlu0 %346, %v299
      %v348 = vpop.permute.xlu0 %347
      %349 = vset.pattern.permute.xlu0 0
      %350 = vperm.xlu0 %349, %v300
      %v351 = vpop.permute.xlu0 %350
      %vm352 = vcmp.eq.s32.totalorder %v302, %v306
      %vm353 = vcmp.eq.s32.totalorder %v303, %v306
      %vm354 = vcmp.eq.s32.totalorder %v302, %v309
      %vm355 = vcmp.eq.s32.totalorder %v303, %v309
      %vm356 = vcmp.eq.s32.totalorder %v302, %v312
      %vm357 = vcmp.eq.s32.totalorder %v303, %v312
      %vm358 = vcmp.eq.s32.totalorder %v302, %v315
      %vm359 = vcmp.eq.s32.totalorder %v303, %v315
      %vm360 = vcmp.eq.s32.totalorder %v302, %v318
      %vm361 = vcmp.eq.s32.totalorder %v303, %v318
      %vm362 = vcmp.eq.s32.totalorder %v302, %v321
      %vm363 = vcmp.eq.s32.totalorder %v303, %v321
      %vm364 = vcmp.eq.s32.totalorder %v302, %v324
      %vm365 = vcmp.eq.s32.totalorder %v303, %v324
      %vm366 = vcmp.eq.s32.totalorder %v302, %v327
      %vm367 = vcmp.eq.s32.totalorder %v303, %v327
      %vm368 = vcmp.eq.s32.totalorder %v302, %v330
      %vm369 = vcmp.eq.s32.totalorder %v303, %v330
      %vm370 = vcmp.eq.s32.totalorder %v302, %v333
      %vm371 = vcmp.eq.s32.totalorder %v303, %v333
      %vm372 = vcmp.eq.s32.totalorder %v302, %v336
      %vm373 = vcmp.eq.s32.totalorder %v303, %v336
      %vm374 = vcmp.eq.s32.totalorder %v302, %v339
      %vm375 = vcmp.eq.s32.totalorder %v303, %v339
      %vm376 = vcmp.eq.s32.totalorder %v302, %v342
      %vm377 = vcmp.eq.s32.totalorder %v303, %v342
      %vm378 = vcmp.eq.s32.totalorder %v302, %v345
      %vm379 = vcmp.eq.s32.totalorder %v303, %v345
      %vm380 = vcmp.eq.s32.totalorder %v302, %v348
      %vm381 = vcmp.eq.s32.totalorder %v303, %v348
      %vm382 = vcmp.eq.s32.totalorder %v302, %v351
      %vm383 = vcmp.eq.s32.totalorder %v303, %v351
      %v384 = vadd.s32 %v285, 32
      %v385 = vadd.s32 %v286, 32
      %v386 = vadd.s32 %v287, 32
      %v387 = vadd.s32 %v288, 32
      %v388 = vadd.s32 %v289, 32
      %v389 = vadd.s32 %v290, 32
      %v390 = vadd.s32 %v291, 32
      %v391 = vadd.s32 %v292, 32
      %v392 = vadd.s32 %v293, 32
      %v393 = vadd.s32 %v294, 32
      %v394 = vadd.s32 %v295, 32
      %v395 = vadd.s32 %v296, 32
      %v396 = vadd.s32 %v297, 32
      %v397 = vadd.s32 %v298, 32
      %v398 = vadd.s32 %v299, 32
      %v399 = vadd.s32 %v300, 32
      %400 = vset.pattern.permute.xlu0 1
      %401 = vperm.xlu0 %400, %v384
      %v402 = vpop.permute.xlu0 %401
      %403 = vset.pattern.permute.xlu0 1
      %404 = vperm.xlu0 %403, %v385
      %v405 = vpop.permute.xlu0 %404
      %406 = vset.pattern.permute.xlu0 1
      %407 = vperm.xlu0 %406, %v386
      %v408 = vpop.permute.xlu0 %407
      %409 = vset.pattern.permute.xlu0 1
      %410 = vperm.xlu0 %409, %v387
      %v411 = vpop.permute.xlu0 %410
      %412 = vset.pattern.permute.xlu0 1
      %413 = vperm.xlu0 %412, %v388
      %v414 = vpop.permute.xlu0 %413
      %415 = vset.pattern.permute.xlu0 1
      %416 = vperm.xlu0 %415, %v389
      %v417 = vpop.permute.xlu0 %416
      %418 = vset.pattern.permute.xlu0 1
      %419 = vperm.xlu0 %418, %v390
      %v420 = vpop.permute.xlu0 %419
      %421 = vset.pattern.permute.xlu0 1
      %422 = vperm.xlu0 %421, %v391
      %v423 = vpop.permute.xlu0 %422
      %424 = vset.pattern.permute.xlu0 1
      %425 = vperm.xlu0 %424, %v392
      %v426 = vpop.permute.xlu0 %425
      %427 = vset.pattern.permute.xlu0 1
      %428 = vperm.xlu0 %427, %v393
      %v429 = vpop.permute.xlu0 %428
      %430 = vset.pattern.permute.xlu0 1
      %431 = vperm.xlu0 %430, %v394
      %v432 = vpop.permute.xlu0 %431
      %433 = vset.pattern.permute.xlu0 1
      %434 = vperm.xlu0 %433, %v395
      %v435 = vpop.permute.xlu0 %434
      %436 = vset.pattern.permute.xlu0 1
      %437 = vperm.xlu0 %436, %v396
      %v438 = vpop.permute.xlu0 %437
      %439 = vset.pattern.permute.xlu0 1
      %440 = vperm.xlu0 %439, %v397
      %v441 = vpop.permute.xlu0 %440
      %442 = vset.pattern.permute.xlu0 1
      %443 = vperm.xlu0 %442, %v398
      %v444 = vpop.permute.xlu0 %443
      %445 = vset.pattern.permute.xlu0 1
      %446 = vperm.xlu0 %445, %v399
      %v447 = vpop.permute.xlu0 %446
      %vm448 = vcmp.eq.s32.totalorder %v302, %v402
      %vm449 = vcmp.eq.s32.totalorder %v303, %v402
      %vm450 = vcmp.eq.s32.totalorder %v302, %v405
      %vm451 = vcmp.eq.s32.totalorder %v303, %v405
      %vm452 = vcmp.eq.s32.totalorder %v302, %v408
      %vm453 = vcmp.eq.s32.totalorder %v303, %v408
      %vm454 = vcmp.eq.s32.totalorder %v302, %v411
      %vm455 = vcmp.eq.s32.totalorder %v303, %v411
      %vm456 = vcmp.eq.s32.totalorder %v302, %v414
      %vm457 = vcmp.eq.s32.totalorder %v303, %v414
      %vm458 = vcmp.eq.s32.totalorder %v302, %v417
      %vm459 = vcmp.eq.s32.totalorder %v303, %v417
      %vm460 = vcmp.eq.s32.totalorder %v302, %v420
      %vm461 = vcmp.eq.s32.totalorder %v303, %v420
      %vm462 = vcmp.eq.s32.totalorder %v302, %v423
      %vm463 = vcmp.eq.s32.totalorder %v303, %v423
      %vm464 = vcmp.eq.s32.totalorder %v302, %v426
      %vm465 = vcmp.eq.s32.totalorder %v303, %v426
      %vm466 = vcmp.eq.s32.totalorder %v302, %v429
      %vm467 = vcmp.eq.s32.totalorder %v303, %v429
      %vm468 = vcmp.eq.s32.totalorder %v302, %v432
      %vm469 = vcmp.eq.s32.totalorder %v303, %v432
      %vm470 = vcmp.eq.s32.totalorder %v302, %v435
      %vm471 = vcmp.eq.s32.totalorder %v303, %v435
      %vm472 = vcmp.eq.s32.totalorder %v302, %v438
      %vm473 = vcmp.eq.s32.totalorder %v303, %v438
      %vm474 = vcmp.eq.s32.totalorder %v302, %v441
      %vm475 = vcmp.eq.s32.totalorder %v303, %v441
      %vm476 = vcmp.eq.s32.totalorder %v302, %v444
      %vm477 = vcmp.eq.s32.totalorder %v303, %v444
      %vm478 = vcmp.eq.s32.totalorder %v302, %v447
      %vm479 = vcmp.eq.s32.totalorder %v303, %v447
      %vm480 = vmor %vm352, %vm448
      %vm481 = vmor %vm353, %vm449
      %vm482 = vmor %vm354, %vm450
      %vm483 = vmor %vm355, %vm451
      %vm484 = vmor %vm356, %vm452
      %vm485 = vmor %vm357, %vm453
      %vm486 = vmor %vm358, %vm454
      %vm487 = vmor %vm359, %vm455
      %vm488 = vmor %vm360, %vm456
      %vm489 = vmor %vm361, %vm457
      %vm490 = vmor %vm362, %vm458
      %vm491 = vmor %vm363, %vm459
      %vm492 = vmor %vm364, %vm460
      %vm493 = vmor %vm365, %vm461
      %vm494 = vmor %vm366, %vm462
      %vm495 = vmor %vm367, %vm463
      %vm496 = vmor %vm368, %vm464
      %vm497 = vmor %vm369, %vm465
      %vm498 = vmor %vm370, %vm466
      %vm499 = vmor %vm371, %vm467
      %vm500 = vmor %vm372, %vm468
      %vm501 = vmor %vm373, %vm469
      %vm502 = vmor %vm374, %vm470
      %vm503 = vmor %vm375, %vm471
      %vm504 = vmor %vm376, %vm472
      %vm505 = vmor %vm377, %vm473
      %vm506 = vmor %vm378, %vm474
      %vm507 = vmor %vm379, %vm475
      %vm508 = vmor %vm380, %vm476
      %vm509 = vmor %vm381, %vm477
      %vm510 = vmor %vm382, %vm478
      %vm511 = vmor %vm383, %vm479
      %v512 = vadd.s32 %v285, 64
      %v513 = vadd.s32 %v286, 64
      %v514 = vadd.s32 %v287, 64
      %v515 = vadd.s32 %v288, 64
      %v516 = vadd.s32 %v289, 64
      %v517 = vadd.s32 %v290, 64
      %v518 = vadd.s32 %v291, 64
      %v519 = vadd.s32 %v292, 64
      %v520 = vadd.s32 %v293, 64
      %v521 = vadd.s32 %v294, 64
      %v522 = vadd.s32 %v295, 64
      %v523 = vadd.s32 %v296, 64
      %v524 = vadd.s32 %v297, 64
      %v525 = vadd.s32 %v298, 64
      %v526 = vadd.s32 %v299, 64
      %v527 = vadd.s32 %v300, 64
      %528 = vset.pattern.permute.xlu0 2
      %529 = vperm.xlu0 %528, %v512
      %v530 = vpop.permute.xlu0 %529
      %531 = vset.pattern.permute.xlu0 2
      %532 = vperm.xlu0 %531, %v513
      %v533 = vpop.permute.xlu0 %532
      %534 = vset.pattern.permute.xlu0 2
      %535 = vperm.xlu0 %534, %v514
      %v536 = vpop.permute.xlu0 %535
      %537 = vset.pattern.permute.xlu0 2
      %538 = vperm.xlu0 %537, %v515
      %v539 = vpop.permute.xlu0 %538
      %540 = vset.pattern.permute.xlu0 2
      %541 = vperm.xlu0 %540, %v516
      %v542 = vpop.permute.xlu0 %541
      %543 = vset.pattern.permute.xlu0 2
      %544 = vperm.xlu0 %543, %v517
      %v545 = vpop.permute.xlu0 %544
      %546 = vset.pattern.permute.xlu0 2
      %547 = vperm.xlu0 %546, %v518
      %v548 = vpop.permute.xlu0 %547
      %549 = vset.pattern.permute.xlu0 2
      %550 = vperm.xlu0 %549, %v519
      %v551 = vpop.permute.xlu0 %550
      %552 = vset.pattern.permute.xlu0 2
      %553 = vperm.xlu0 %552, %v520
      %v554 = vpop.permute.xlu0 %553
      %555 = vset.pattern.permute.xlu0 2
      %556 = vperm.xlu0 %555, %v521
      %v557 = vpop.permute.xlu0 %556
      %558 = vset.pattern.permute.xlu0 2
      %559 = vperm.xlu0 %558, %v522
      %v560 = vpop.permute.xlu0 %559
      %561 = vset.pattern.permute.xlu0 2
      %562 = vperm.xlu0 %561, %v523
      %v563 = vpop.permute.xlu0 %562
      %564 = vset.pattern.permute.xlu0 2
      %565 = vperm.xlu0 %564, %v524
      %v566 = vpop.permute.xlu0 %565
      %567 = vset.pattern.permute.xlu0 2
      %568 = vperm.xlu0 %567, %v525
      %v569 = vpop.permute.xlu0 %568
      %570 = vset.pattern.permute.xlu0 2
      %571 = vperm.xlu0 %570, %v526
      %v572 = vpop.permute.xlu0 %571
      %573 = vset.pattern.permute.xlu0 2
      %574 = vperm.xlu0 %573, %v527
      %v575 = vpop.permute.xlu0 %574
      %vm576 = vcmp.eq.s32.totalorder %v302, %v530
      %vm577 = vcmp.eq.s32.totalorder %v303, %v530
      %vm578 = vcmp.eq.s32.totalorder %v302, %v533
      %vm579 = vcmp.eq.s32.totalorder %v303, %v533
      %vm580 = vcmp.eq.s32.totalorder %v302, %v536
      %vm581 = vcmp.eq.s32.totalorder %v303, %v536
      %vm582 = vcmp.eq.s32.totalorder %v302, %v539
      %vm583 = vcmp.eq.s32.totalorder %v303, %v539
      %vm584 = vcmp.eq.s32.totalorder %v302, %v542
      %vm585 = vcmp.eq.s32.totalorder %v303, %v542
      %vm586 = vcmp.eq.s32.totalorder %v302, %v545
      %vm587 = vcmp.eq.s32.totalorder %v303, %v545
      %vm588 = vcmp.eq.s32.totalorder %v302, %v548
      %vm589 = vcmp.eq.s32.totalorder %v303, %v548
      %vm590 = vcmp.eq.s32.totalorder %v302, %v551
      %vm591 = vcmp.eq.s32.totalorder %v303, %v551
      %vm592 = vcmp.eq.s32.totalorder %v302, %v554
      %vm593 = vcmp.eq.s32.totalorder %v303, %v554
      %vm594 = vcmp.eq.s32.totalorder %v302, %v557
      %vm595 = vcmp.eq.s32.totalorder %v303, %v557
      %vm596 = vcmp.eq.s32.totalorder %v302, %v560
      %vm597 = vcmp.eq.s32.totalorder %v303, %v560
      %vm598 = vcmp.eq.s32.totalorder %v302, %v563
      %vm599 = vcmp.eq.s32.totalorder %v303, %v563
      %vm600 = vcmp.eq.s32.totalorder %v302, %v566
      %vm601 = vcmp.eq.s32.totalorder %v303, %v566
      %vm602 = vcmp.eq.s32.totalorder %v302, %v569
      %vm603 = vcmp.eq.s32.totalorder %v303, %v569
      %vm604 = vcmp.eq.s32.totalorder %v302, %v572
      %vm605 = vcmp.eq.s32.totalorder %v303, %v572
      %vm606 = vcmp.eq.s32.totalorder %v302, %v575
      %vm607 = vcmp.eq.s32.totalorder %v303, %v575
      %vm608 = vmor %vm480, %vm576
      %vm609 = vmor %vm481, %vm577
      %vm610 = vmor %vm482, %vm578
      %vm611 = vmor %vm483, %vm579
      %vm612 = vmor %vm484, %vm580
      %vm613 = vmor %vm485, %vm581
      %vm614 = vmor %vm486, %vm582
      %vm615 = vmor %vm487, %vm583
      %vm616 = vmor %vm488, %vm584
      %vm617 = vmor %vm489, %vm585
      %vm618 = vmor %vm490, %vm586
      %vm619 = vmor %vm491, %vm587
      %vm620 = vmor %vm492, %vm588
      %vm621 = vmor %vm493, %vm589
      %vm622 = vmor %vm494, %vm590
      %vm623 = vmor %vm495, %vm591
      %vm624 = vmor %vm496, %vm592
      %vm625 = vmor %vm497, %vm593
      %vm626 = vmor %vm498, %vm594
      %vm627 = vmor %vm499, %vm595
      %vm628 = vmor %vm500, %vm596
      %vm629 = vmor %vm501, %vm597
      %vm630 = vmor %vm502, %vm598
      %vm631 = vmor %vm503, %vm599
      %vm632 = vmor %vm504, %vm600
      %vm633 = vmor %vm505, %vm601
      %vm634 = vmor %vm506, %vm602
      %vm635 = vmor %vm507, %vm603
      %vm636 = vmor %vm508, %vm604
      %vm637 = vmor %vm509, %vm605
      %vm638 = vmor %vm510, %vm606
      %vm639 = vmor %vm511, %vm607
      %v640 = vadd.s32 %v285, 96
      %v641 = vadd.s32 %v286, 96
      %v642 = vadd.s32 %v287, 96
      %v643 = vadd.s32 %v288, 96
      %v644 = vadd.s32 %v289, 96
      %v645 = vadd.s32 %v290, 96
      %v646 = vadd.s32 %v291, 96
      %v647 = vadd.s32 %v292, 96
      %v648 = vadd.s32 %v293, 96
      %v649 = vadd.s32 %v294, 96
      %v650 = vadd.s32 %v295, 96
      %v651 = vadd.s32 %v296, 96
      %v652 = vadd.s32 %v297, 96
      %v653 = vadd.s32 %v298, 96
      %v654 = vadd.s32 %v299, 96
      %v655 = vadd.s32 %v300, 96
      %656 = vset.pattern.permute.xlu0 3
      %657 = vperm.xlu0 %656, %v640
      %v658 = vpop.permute.xlu0 %657
      %659 = vset.pattern.permute.xlu0 3
      %660 = vperm.xlu0 %659, %v641
      %v661 = vpop.permute.xlu0 %660
      %662 = vset.pattern.permute.xlu0 3
      %663 = vperm.xlu0 %662, %v642
      %v664 = vpop.permute.xlu0 %663
      %665 = vset.pattern.permute.xlu0 3
      %666 = vperm.xlu0 %665, %v643
      %v667 = vpop.permute.xlu0 %666
      %668 = vset.pattern.permute.xlu0 3
      %669 = vperm.xlu0 %668, %v644
      %v670 = vpop.permute.xlu0 %669
      %671 = vset.pattern.permute.xlu0 3
      %672 = vperm.xlu0 %671, %v645
      %v673 = vpop.permute.xlu0 %672
      %674 = vset.pattern.permute.xlu0 3
      %675 = vperm.xlu0 %674, %v646
      %v676 = vpop.permute.xlu0 %675
      %677 = vset.pattern.permute.xlu0 3
      %678 = vperm.xlu0 %677, %v647
      %v679 = vpop.permute.xlu0 %678
      %680 = vset.pattern.permute.xlu0 3
      %681 = vperm.xlu0 %680, %v648
      %v682 = vpop.permute.xlu0 %681
      %683 = vset.pattern.permute.xlu0 3
      %684 = vperm.xlu0 %683, %v649
      %v685 = vpop.permute.xlu0 %684
      %686 = vset.pattern.permute.xlu0 3
      %687 = vperm.xlu0 %686, %v650
      %v688 = vpop.permute.xlu0 %687
      %689 = vset.pattern.permute.xlu0 3
      %690 = vperm.xlu0 %689, %v651
      %v691 = vpop.permute.xlu0 %690
      %692 = vset.pattern.permute.xlu0 3
      %693 = vperm.xlu0 %692, %v652
      %v694 = vpop.permute.xlu0 %693
      %695 = vset.pattern.permute.xlu0 3
      %696 = vperm.xlu0 %695, %v653
      %v697 = vpop.permute.xlu0 %696
      %698 = vset.pattern.permute.xlu0 3
      %699 = vperm.xlu0 %698, %v654
      %v700 = vpop.permute.xlu0 %699
      %701 = vset.pattern.permute.xlu0 3
      %702 = vperm.xlu0 %701, %v655
      %v703 = vpop.permute.xlu0 %702
      %vm704 = vcmp.eq.s32.totalorder %v302, %v658
      %vm705 = vcmp.eq.s32.totalorder %v303, %v658
      %vm706 = vcmp.eq.s32.totalorder %v302, %v661
      %vm707 = vcmp.eq.s32.totalorder %v303, %v661
      %vm708 = vcmp.eq.s32.totalorder %v302, %v664
      %vm709 = vcmp.eq.s32.totalorder %v303, %v664
      %vm710 = vcmp.eq.s32.totalorder %v302, %v667
      %vm711 = vcmp.eq.s32.totalorder %v303, %v667
      %vm712 = vcmp.eq.s32.totalorder %v302, %v670
      %vm713 = vcmp.eq.s32.totalorder %v303, %v670
      %vm714 = vcmp.eq.s32.totalorder %v302, %v673
      %vm715 = vcmp.eq.s32.totalorder %v303, %v673
      %vm716 = vcmp.eq.s32.totalorder %v302, %v676
      %vm717 = vcmp.eq.s32.totalorder %v303, %v676
      %vm718 = vcmp.eq.s32.totalorder %v302, %v679
      %vm719 = vcmp.eq.s32.totalorder %v303, %v679
      %vm720 = vcmp.eq.s32.totalorder %v302, %v682
      %vm721 = vcmp.eq.s32.totalorder %v303, %v682
      %vm722 = vcmp.eq.s32.totalorder %v302, %v685
      %vm723 = vcmp.eq.s32.totalorder %v303, %v685
      %vm724 = vcmp.eq.s32.totalorder %v302, %v688
      %vm725 = vcmp.eq.s32.totalorder %v303, %v688
      %vm726 = vcmp.eq.s32.totalorder %v302, %v691
      %vm727 = vcmp.eq.s32.totalorder %v303, %v691
      %vm728 = vcmp.eq.s32.totalorder %v302, %v694
      %vm729 = vcmp.eq.s32.totalorder %v303, %v694
      %vm730 = vcmp.eq.s32.totalorder %v302, %v697
      %vm731 = vcmp.eq.s32.totalorder %v303, %v697
      %vm732 = vcmp.eq.s32.totalorder %v302, %v700
      %vm733 = vcmp.eq.s32.totalorder %v303, %v700
      %vm734 = vcmp.eq.s32.totalorder %v302, %v703
      %vm735 = vcmp.eq.s32.totalorder %v303, %v703
      %vm736 = vmor %vm608, %vm704
      %vm737 = vmor %vm609, %vm705
      %vm738 = vmor %vm610, %vm706
      %vm739 = vmor %vm611, %vm707
      %vm740 = vmor %vm612, %vm708
      %vm741 = vmor %vm613, %vm709
      %vm742 = vmor %vm614, %vm710
      %vm743 = vmor %vm615, %vm711
      %vm744 = vmor %vm616, %vm712
      %vm745 = vmor %vm617, %vm713
      %vm746 = vmor %vm618, %vm714
      %vm747 = vmor %vm619, %vm715
      %vm748 = vmor %vm620, %vm716
      %vm749 = vmor %vm621, %vm717
      %vm750 = vmor %vm622, %vm718
      %vm751 = vmor %vm623, %vm719
      %vm752 = vmor %vm624, %vm720
      %vm753 = vmor %vm625, %vm721
      %vm754 = vmor %vm626, %vm722
      %vm755 = vmor %vm627, %vm723
      %vm756 = vmor %vm628, %vm724
      %vm757 = vmor %vm629, %vm725
      %vm758 = vmor %vm630, %vm726
      %vm759 = vmor %vm631, %vm727
      %vm760 = vmor %vm632, %vm728
      %vm761 = vmor %vm633, %vm729
      %vm762 = vmor %vm634, %vm730
      %vm763 = vmor %vm635, %vm731
      %vm764 = vmor %vm636, %vm732
      %vm765 = vmor %vm637, %vm733
      %vm766 = vmor %vm638, %vm734
      %vm767 = vmor %vm639, %vm735
      %v768 = vadd.s32 %v285, 128
      %v769 = vadd.s32 %v286, 128
      %v770 = vadd.s32 %v287, 128
      %v771 = vadd.s32 %v288, 128
      %v772 = vadd.s32 %v289, 128
      %v773 = vadd.s32 %v290, 128
      %v774 = vadd.s32 %v291, 128
      %v775 = vadd.s32 %v292, 128
      %v776 = vadd.s32 %v293, 128
      %v777 = vadd.s32 %v294, 128
      %v778 = vadd.s32 %v295, 128
      %v779 = vadd.s32 %v296, 128
      %v780 = vadd.s32 %v297, 128
      %v781 = vadd.s32 %v298, 128
      %v782 = vadd.s32 %v299, 128
      %v783 = vadd.s32 %v300, 128
      %784 = vset.pattern.permute.xlu0 4
      %785 = vperm.xlu0 %784, %v768
      %v786 = vpop.permute.xlu0 %785
      %787 = vset.pattern.permute.xlu0 4
      %788 = vperm.xlu0 %787, %v769
      %v789 = vpop.permute.xlu0 %788
      %790 = vset.pattern.permute.xlu0 4
      %791 = vperm.xlu0 %790, %v770
      %v792 = vpop.permute.xlu0 %791
      %793 = vset.pattern.permute.xlu0 4
      %794 = vperm.xlu0 %793, %v771
      %v795 = vpop.permute.xlu0 %794
      %796 = vset.pattern.permute.xlu0 4
      %797 = vperm.xlu0 %796, %v772
      %v798 = vpop.permute.xlu0 %797
      %799 = vset.pattern.permute.xlu0 4
      %800 = vperm.xlu0 %799, %v773
      %v801 = vpop.permute.xlu0 %800
      %802 = vset.pattern.permute.xlu0 4
      %803 = vperm.xlu0 %802, %v774
      %v804 = vpop.permute.xlu0 %803
      %805 = vset.pattern.permute.xlu0 4
      %806 = vperm.xlu0 %805, %v775
      %v807 = vpop.permute.xlu0 %806
      %808 = vset.pattern.permute.xlu0 4
      %809 = vperm.xlu0 %808, %v776
      %v810 = vpop.permute.xlu0 %809
      %811 = vset.pattern.permute.xlu0 4
      %812 = vperm.xlu0 %811, %v777
      %v813 = vpop.permute.xlu0 %812
      %814 = vset.pattern.permute.xlu0 4
      %815 = vperm.xlu0 %814, %v778
      %v816 = vpop.permute.xlu0 %815
      %817 = vset.pattern.permute.xlu0 4
      %818 = vperm.xlu0 %817, %v779
      %v819 = vpop.permute.xlu0 %818
      %820 = vset.pattern.permute.xlu0 4
      %821 = vperm.xlu0 %820, %v780
      %v822 = vpop.permute.xlu0 %821
      %823 = vset.pattern.permute.xlu0 4
      %824 = vperm.xlu0 %823, %v781
      %v825 = vpop.permute.xlu0 %824
      %826 = vset.pattern.permute.xlu0 4
      %827 = vperm.xlu0 %826, %v782
      %v828 = vpop.permute.xlu0 %827
      %829 = vset.pattern.permute.xlu0 4
      %830 = vperm.xlu0 %829, %v783
      %v831 = vpop.permute.xlu0 %830
      %vm832 = vcmp.eq.s32.totalorder %v302, %v786
      %vm833 = vcmp.eq.s32.totalorder %v303, %v786
      %vm834 = vcmp.eq.s32.totalorder %v302, %v789
      %vm835 = vcmp.eq.s32.totalorder %v303, %v789
      %vm836 = vcmp.eq.s32.totalorder %v302, %v792
      %vm837 = vcmp.eq.s32.totalorder %v303, %v792
      %vm838 = vcmp.eq.s32.totalorder %v302, %v795
      %vm839 = vcmp.eq.s32.totalorder %v303, %v795
      %vm840 = vcmp.eq.s32.totalorder %v302, %v798
      %vm841 = vcmp.eq.s32.totalorder %v303, %v798
      %vm842 = vcmp.eq.s32.totalorder %v302, %v801
      %vm843 = vcmp.eq.s32.totalorder %v303, %v801
      %vm844 = vcmp.eq.s32.totalorder %v302, %v804
      %vm845 = vcmp.eq.s32.totalorder %v303, %v804
      %vm846 = vcmp.eq.s32.totalorder %v302, %v807
      %vm847 = vcmp.eq.s32.totalorder %v303, %v807
      %vm848 = vcmp.eq.s32.totalorder %v302, %v810
      %vm849 = vcmp.eq.s32.totalorder %v303, %v810
      %vm850 = vcmp.eq.s32.totalorder %v302, %v813
      %vm851 = vcmp.eq.s32.totalorder %v303, %v813
      %vm852 = vcmp.eq.s32.totalorder %v302, %v816
      %vm853 = vcmp.eq.s32.totalorder %v303, %v816
      %vm854 = vcmp.eq.s32.totalorder %v302, %v819
      %vm855 = vcmp.eq.s32.totalorder %v303, %v819
      %vm856 = vcmp.eq.s32.totalorder %v302, %v822
      %vm857 = vcmp.eq.s32.totalorder %v303, %v822
      %vm858 = vcmp.eq.s32.totalorder %v302, %v825
      %vm859 = vcmp.eq.s32.totalorder %v303, %v825
      %vm860 = vcmp.eq.s32.totalorder %v302, %v828
      %vm861 = vcmp.eq.s32.totalorder %v303, %v828
      %vm862 = vcmp.eq.s32.totalorder %v302, %v831
      %vm863 = vcmp.eq.s32.totalorder %v303, %v831
      %vm864 = vmor %vm736, %vm832
      %vm865 = vmor %vm737, %vm833
      %vm866 = vmor %vm738, %vm834
      %vm867 = vmor %vm739, %vm835
      %vm868 = vmor %vm740, %vm836
      %vm869 = vmor %vm741, %vm837
      %vm870 = vmor %vm742, %vm838
      %vm871 = vmor %vm743, %vm839
      %vm872 = vmor %vm744, %vm840
      %vm873 = vmor %vm745, %vm841
      %vm874 = vmor %vm746, %vm842
      %vm875 = vmor %vm747, %vm843
      %vm876 = vmor %vm748, %vm844
      %vm877 = vmor %vm749, %vm845
      %vm878 = vmor %vm750, %vm846
      %vm879 = vmor %vm751, %vm847
      %vm880 = vmor %vm752, %vm848
      %vm881 = vmor %vm753, %vm849
      %vm882 = vmor %vm754, %vm850
      %vm883 = vmor %vm755, %vm851
      %vm884 = vmor %vm756, %vm852
      %vm885 = vmor %vm757, %vm853
      %vm886 = vmor %vm758, %vm854
      %vm887 = vmor %vm759, %vm855
      %vm888 = vmor %vm760, %vm856
      %vm889 = vmor %vm761, %vm857
      %vm890 = vmor %vm762, %vm858
      %vm891 = vmor %vm763, %vm859
      %vm892 = vmor %vm764, %vm860
      %vm893 = vmor %vm765, %vm861
      %vm894 = vmor %vm766, %vm862
      %vm895 = vmor %vm767, %vm863
      %v896 = vadd.s32 %v285, 160
      %v897 = vadd.s32 %v286, 160
      %v898 = vadd.s32 %v287, 160
      %v899 = vadd.s32 %v288, 160
      %v900 = vadd.s32 %v289, 160
      %v901 = vadd.s32 %v290, 160
      %v902 = vadd.s32 %v291, 160
      %v903 = vadd.s32 %v292, 160
      %v904 = vadd.s32 %v293, 160
      %v905 = vadd.s32 %v294, 160
      %v906 = vadd.s32 %v295, 160
      %v907 = vadd.s32 %v296, 160
      %v908 = vadd.s32 %v297, 160
      %v909 = vadd.s32 %v298, 160
      %v910 = vadd.s32 %v299, 160
      %v911 = vadd.s32 %v300, 160
      %912 = vset.pattern.permute.xlu0 5
      %913 = vperm.xlu0 %912, %v896
      %v914 = vpop.permute.xlu0 %913
      %915 = vset.pattern.permute.xlu0 5
      %916 = vperm.xlu0 %915, %v897
      %v917 = vpop.permute.xlu0 %916
      %918 = vset.pattern.permute.xlu0 5
      %919 = vperm.xlu0 %918, %v898
      %v920 = vpop.permute.xlu0 %919
      %921 = vset.pattern.permute.xlu0 5
      %922 = vperm.xlu0 %921, %v899
      %v923 = vpop.permute.xlu0 %922
      %924 = vset.pattern.permute.xlu0 5
      %925 = vperm.xlu0 %924, %v900
      %v926 = vpop.permute.xlu0 %925
      %927 = vset.pattern.permute.xlu0 5
      %928 = vperm.xlu0 %927, %v901
      %v929 = vpop.permute.xlu0 %928
      %930 = vset.pattern.permute.xlu0 5
      %931 = vperm.xlu0 %930, %v902
      %v932 = vpop.permute.xlu0 %931
      %933 = vset.pattern.permute.xlu0 5
      %934 = vperm.xlu0 %933, %v903
      %v935 = vpop.permute.xlu0 %934
      %936 = vset.pattern.permute.xlu0 5
      %937 = vperm.xlu0 %936, %v904
      %v938 = vpop.permute.xlu0 %937
      %939 = vset.pattern.permute.xlu0 5
      %940 = vperm.xlu0 %939, %v905
      %v941 = vpop.permute.xlu0 %940
      %942 = vset.pattern.permute.xlu0 5
      %943 = vperm.xlu0 %942, %v906
      %v944 = vpop.permute.xlu0 %943
      %945 = vset.pattern.permute.xlu0 5
      %946 = vperm.xlu0 %945, %v907
      %v947 = vpop.permute.xlu0 %946
      %948 = vset.pattern.permute.xlu0 5
      %949 = vperm.xlu0 %948, %v908
      %v950 = vpop.permute.xlu0 %949
      %951 = vset.pattern.permute.xlu0 5
      %952 = vperm.xlu0 %951, %v909
      %v953 = vpop.permute.xlu0 %952
      %954 = vset.pattern.permute.xlu0 5
      %955 = vperm.xlu0 %954, %v910
      %v956 = vpop.permute.xlu0 %955
      %957 = vset.pattern.permute.xlu0 5
      %958 = vperm.xlu0 %957, %v911
      %v959 = vpop.permute.xlu0 %958
      %vm960 = vcmp.eq.s32.totalorder %v302, %v914
      %vm961 = vcmp.eq.s32.totalorder %v303, %v914
      %vm962 = vcmp.eq.s32.totalorder %v302, %v917
      %vm963 = vcmp.eq.s32.totalorder %v303, %v917
      %vm964 = vcmp.eq.s32.totalorder %v302, %v920
      %vm965 = vcmp.eq.s32.totalorder %v303, %v920
      %vm966 = vcmp.eq.s32.totalorder %v302, %v923
      %vm967 = vcmp.eq.s32.totalorder %v303, %v923
      %vm968 = vcmp.eq.s32.totalorder %v302, %v926
      %vm969 = vcmp.eq.s32.totalorder %v303, %v926
      %vm970 = vcmp.eq.s32.totalorder %v302, %v929
      %vm971 = vcmp.eq.s32.totalorder %v303, %v929
      %vm972 = vcmp.eq.s32.totalorder %v302, %v932
      %vm973 = vcmp.eq.s32.totalorder %v303, %v932
      %vm974 = vcmp.eq.s32.totalorder %v302, %v935
      %vm975 = vcmp.eq.s32.totalorder %v303, %v935
      %vm976 = vcmp.eq.s32.totalorder %v302, %v938
      %vm977 = vcmp.eq.s32.totalorder %v303, %v938
      %vm978 = vcmp.eq.s32.totalorder %v302, %v941
      %vm979 = vcmp.eq.s32.totalorder %v303, %v941
      %vm980 = vcmp.eq.s32.totalorder %v302, %v944
      %vm981 = vcmp.eq.s32.totalorder %v303, %v944
      %vm982 = vcmp.eq.s32.totalorder %v302, %v947
      %vm983 = vcmp.eq.s32.totalorder %v303, %v947
      %vm984 = vcmp.eq.s32.totalorder %v302, %v950
      %vm985 = vcmp.eq.s32.totalorder %v303, %v950
      %vm986 = vcmp.eq.s32.totalorder %v302, %v953
      %vm987 = vcmp.eq.s32.totalorder %v303, %v953
      %vm988 = vcmp.eq.s32.totalorder %v302, %v956
      %vm989 = vcmp.eq.s32.totalorder %v303, %v956
      %vm990 = vcmp.eq.s32.totalorder %v302, %v959
      %vm991 = vcmp.eq.s32.totalorder %v303, %v959
      %vm992 = vmor %vm864, %vm960
      %vm993 = vmor %vm865, %vm961
      %vm994 = vmor %vm866, %vm962
      %vm995 = vmor %vm867, %vm963
      %vm996 = vmor %vm868, %vm964
      %vm997 = vmor %vm869, %vm965
      %vm998 = vmor %vm870, %vm966
      %vm999 = vmor %vm871, %vm967
      %vm1000 = vmor %vm872, %vm968
      %vm1001 = vmor %vm873, %vm969
      %vm1002 = vmor %vm874, %vm970
      %vm1003 = vmor %vm875, %vm971
      %vm1004 = vmor %vm876, %vm972
      %vm1005 = vmor %vm877, %vm973
      %vm1006 = vmor %vm878, %vm974
      %vm1007 = vmor %vm879, %vm975
      %vm1008 = vmor %vm880, %vm976
      %vm1009 = vmor %vm881, %vm977
      %vm1010 = vmor %vm882, %vm978
      %vm1011 = vmor %vm883, %vm979
      %vm1012 = vmor %vm884, %vm980
      %vm1013 = vmor %vm885, %vm981
      %vm1014 = vmor %vm886, %vm982
      %vm1015 = vmor %vm887, %vm983
      %vm1016 = vmor %vm888, %vm984
      %vm1017 = vmor %vm889, %vm985
      %vm1018 = vmor %vm890, %vm986
      %vm1019 = vmor %vm891, %vm987
      %vm1020 = vmor %vm892, %vm988
      %vm1021 = vmor %vm893, %vm989
      %vm1022 = vmor %vm894, %vm990
      %vm1023 = vmor %vm895, %vm991
      %v1024 = vadd.s32 %v285, 192
      %v1025 = vadd.s32 %v286, 192
      %v1026 = vadd.s32 %v287, 192
      %v1027 = vadd.s32 %v288, 192
      %v1028 = vadd.s32 %v289, 192
      %v1029 = vadd.s32 %v290, 192
      %v1030 = vadd.s32 %v291, 192
      %v1031 = vadd.s32 %v292, 192
      %v1032 = vadd.s32 %v293, 192
      %v1033 = vadd.s32 %v294, 192
      %v1034 = vadd.s32 %v295, 192
      %v1035 = vadd.s32 %v296, 192
      %v1036 = vadd.s32 %v297, 192
      %v1037 = vadd.s32 %v298, 192
      %v1038 = vadd.s32 %v299, 192
      %v1039 = vadd.s32 %v300, 192
      %1040 = vset.pattern.permute.xlu0 6
      %1041 = vperm.xlu0 %1040, %v1024
      %v1042 = vpop.permute.xlu0 %1041
      %1043 = vset.pattern.permute.xlu0 6
      %1044 = vperm.xlu0 %1043, %v1025
      %v1045 = vpop.permute.xlu0 %1044
      %1046 = vset.pattern.permute.xlu0 6
      %1047 = vperm.xlu0 %1046, %v1026
      %v1048 = vpop.permute.xlu0 %1047
      %1049 = vset.pattern.permute.xlu0 6
      %1050 = vperm.xlu0 %1049, %v1027
      %v1051 = vpop.permute.xlu0 %1050
      %1052 = vset.pattern.permute.xlu0 6
      %1053 = vperm.xlu0 %1052, %v1028
      %v1054 = vpop.permute.xlu0 %1053
      %1055 = vset.pattern.permute.xlu0 6
      %1056 = vperm.xlu0 %1055, %v1029
      %v1057 = vpop.permute.xlu0 %1056
      %1058 = vset.pattern.permute.xlu0 6
      %1059 = vperm.xlu0 %1058, %v1030
      %v1060 = vpop.permute.xlu0 %1059
      %1061 = vset.pattern.permute.xlu0 6
      %1062 = vperm.xlu0 %1061, %v1031
      %v1063 = vpop.permute.xlu0 %1062
      %1064 = vset.pattern.permute.xlu0 6
      %1065 = vperm.xlu0 %1064, %v1032
      %v1066 = vpop.permute.xlu0 %1065
      %1067 = vset.pattern.permute.xlu0 6
      %1068 = vperm.xlu0 %1067, %v1033
      %v1069 = vpop.permute.xlu0 %1068
      %1070 = vset.pattern.permute.xlu0 6
      %1071 = vperm.xlu0 %1070, %v1034
      %v1072 = vpop.permute.xlu0 %1071
      %1073 = vset.pattern.permute.xlu0 6
      %1074 = vperm.xlu0 %1073, %v1035
      %v1075 = vpop.permute.xlu0 %1074
      %1076 = vset.pattern.permute.xlu0 6
      %1077 = vperm.xlu0 %1076, %v1036
      %v1078 = vpop.permute.xlu0 %1077
      %1079 = vset.pattern.permute.xlu0 6
      %1080 = vperm.xlu0 %1079, %v1037
      %v1081 = vpop.permute.xlu0 %1080
      %1082 = vset.pattern.permute.xlu0 6
      %1083 = vperm.xlu0 %1082, %v1038
      %v1084 = vpop.permute.xlu0 %1083
      %1085 = vset.pattern.permute.xlu0 6
      %1086 = vperm.xlu0 %1085, %v1039
      %v1087 = vpop.permute.xlu0 %1086
      %vm1088 = vcmp.eq.s32.totalorder %v302, %v1042
      %vm1089 = vcmp.eq.s32.totalorder %v303, %v1042
      %vm1090 = vcmp.eq.s32.totalorder %v302, %v1045
      %vm1091 = vcmp.eq.s32.totalorder %v303, %v1045
      %vm1092 = vcmp.eq.s32.totalorder %v302, %v1048
      %vm1093 = vcmp.eq.s32.totalorder %v303, %v1048
      %vm1094 = vcmp.eq.s32.totalorder %v302, %v1051
      %vm1095 = vcmp.eq.s32.totalorder %v303, %v1051
      %vm1096 = vcmp.eq.s32.totalorder %v302, %v1054
      %vm1097 = vcmp.eq.s32.totalorder %v303, %v1054
      %vm1098 = vcmp.eq.s32.totalorder %v302, %v1057
      %vm1099 = vcmp.eq.s32.totalorder %v303, %v1057
      %vm1100 = vcmp.eq.s32.totalorder %v302, %v1060
      %vm1101 = vcmp.eq.s32.totalorder %v303, %v1060
      %vm1102 = vcmp.eq.s32.totalorder %v302, %v1063
      %vm1103 = vcmp.eq.s32.totalorder %v303, %v1063
      %vm1104 = vcmp.eq.s32.totalorder %v302, %v1066
      %vm1105 = vcmp.eq.s32.totalorder %v303, %v1066
      %vm1106 = vcmp.eq.s32.totalorder %v302, %v1069
      %vm1107 = vcmp.eq.s32.totalorder %v303, %v1069
      %vm1108 = vcmp.eq.s32.totalorder %v302, %v1072
      %vm1109 = vcmp.eq.s32.totalorder %v303, %v1072
      %vm1110 = vcmp.eq.s32.totalorder %v302, %v1075
      %vm1111 = vcmp.eq.s32.totalorder %v303, %v1075
      %vm1112 = vcmp.eq.s32.totalorder %v302, %v1078
      %vm1113 = vcmp.eq.s32.totalorder %v303, %v1078
      %vm1114 = vcmp.eq.s32.totalorder %v302, %v1081
      %vm1115 = vcmp.eq.s32.totalorder %v303, %v1081
      %vm1116 = vcmp.eq.s32.totalorder %v302, %v1084
      %vm1117 = vcmp.eq.s32.totalorder %v303, %v1084
      %vm1118 = vcmp.eq.s32.totalorder %v302, %v1087
      %vm1119 = vcmp.eq.s32.totalorder %v303, %v1087
      %vm1120 = vmor %vm992, %vm1088
      %vm1121 = vmor %vm993, %vm1089
      %vm1122 = vmor %vm994, %vm1090
      %vm1123 = vmor %vm995, %vm1091
      %vm1124 = vmor %vm996, %vm1092
      %vm1125 = vmor %vm997, %vm1093
      %vm1126 = vmor %vm998, %vm1094
      %vm1127 = vmor %vm999, %vm1095
      %vm1128 = vmor %vm1000, %vm1096
      %vm1129 = vmor %vm1001, %vm1097
      %vm1130 = vmor %vm1002, %vm1098
      %vm1131 = vmor %vm1003, %vm1099
      %vm1132 = vmor %vm1004, %vm1100
      %vm1133 = vmor %vm1005, %vm1101
      %vm1134 = vmor %vm1006, %vm1102
      %vm1135 = vmor %vm1007, %vm1103
      %vm1136 = vmor %vm1008, %vm1104
      %vm1137 = vmor %vm1009, %vm1105
      %vm1138 = vmor %vm1010, %vm1106
      %vm1139 = vmor %vm1011, %vm1107
      %vm1140 = vmor %vm1012, %vm1108
      %vm1141 = vmor %vm1013, %vm1109
      %vm1142 = vmor %vm1014, %vm1110
      %vm1143 = vmor %vm1015, %vm1111
      %vm1144 = vmor %vm1016, %vm1112
      %vm1145 = vmor %vm1017, %vm1113
      %vm1146 = vmor %vm1018, %vm1114
      %vm1147 = vmor %vm1019, %vm1115
      %vm1148 = vmor %vm1020, %vm1116
      %vm1149 = vmor %vm1021, %vm1117
      %vm1150 = vmor %vm1022, %vm1118
      %vm1151 = vmor %vm1023, %vm1119
      %v1152 = vadd.s32 %v285, 224
      %v1153 = vadd.s32 %v286, 224
      %v1154 = vadd.s32 %v287, 224
      %v1155 = vadd.s32 %v288, 224
      %v1156 = vadd.s32 %v289, 224
      %v1157 = vadd.s32 %v290, 224
      %v1158 = vadd.s32 %v291, 224
      %v1159 = vadd.s32 %v292, 224
      %v1160 = vadd.s32 %v293, 224
      %v1161 = vadd.s32 %v294, 224
      %v1162 = vadd.s32 %v295, 224
      %v1163 = vadd.s32 %v296, 224
      %v1164 = vadd.s32 %v297, 224
      %v1165 = vadd.s32 %v298, 224
      %v1166 = vadd.s32 %v299, 224
      %v1167 = vadd.s32 %v300, 224
      %1168 = vset.pattern.permute.xlu0 7
      %1169 = vperm.xlu0 %1168, %v1152
      %v1170 = vpop.permute.xlu0 %1169
      %1171 = vset.pattern.permute.xlu0 7
      %1172 = vperm.xlu0 %1171, %v1153
      %v1173 = vpop.permute.xlu0 %1172
      %1174 = vset.pattern.permute.xlu0 7
      %1175 = vperm.xlu0 %1174, %v1154
      %v1176 = vpop.permute.xlu0 %1175
      %1177 = vset.pattern.permute.xlu0 7
      %1178 = vperm.xlu0 %1177, %v1155
      %v1179 = vpop.permute.xlu0 %1178
      %1180 = vset.pattern.permute.xlu0 7
      %1181 = vperm.xlu0 %1180, %v1156
      %v1182 = vpop.permute.xlu0 %1181
      %1183 = vset.pattern.permute.xlu0 7
      %1184 = vperm.xlu0 %1183, %v1157
      %v1185 = vpop.permute.xlu0 %1184
      %1186 = vset.pattern.permute.xlu0 7
      %1187 = vperm.xlu0 %1186, %v1158
      %v1188 = vpop.permute.xlu0 %1187
      %1189 = vset.pattern.permute.xlu0 7
      %1190 = vperm.xlu0 %1189, %v1159
      %v1191 = vpop.permute.xlu0 %1190
      %1192 = vset.pattern.permute.xlu0 7
      %1193 = vperm.xlu0 %1192, %v1160
      %v1194 = vpop.permute.xlu0 %1193
      %1195 = vset.pattern.permute.xlu0 7
      %1196 = vperm.xlu0 %1195, %v1161
      %v1197 = vpop.permute.xlu0 %1196
      %1198 = vset.pattern.permute.xlu0 7
      %1199 = vperm.xlu0 %1198, %v1162
      %v1200 = vpop.permute.xlu0 %1199
      %1201 = vset.pattern.permute.xlu0 7
      %1202 = vperm.xlu0 %1201, %v1163
      %v1203 = vpop.permute.xlu0 %1202
      %1204 = vset.pattern.permute.xlu0 7
      %1205 = vperm.xlu0 %1204, %v1164
      %v1206 = vpop.permute.xlu0 %1205
      %1207 = vset.pattern.permute.xlu0 7
      %1208 = vperm.xlu0 %1207, %v1165
      %v1209 = vpop.permute.xlu0 %1208
      %1210 = vset.pattern.permute.xlu0 7
      %1211 = vperm.xlu0 %1210, %v1166
      %v1212 = vpop.permute.xlu0 %1211
      %1213 = vset.pattern.permute.xlu0 7
      %1214 = vperm.xlu0 %1213, %v1167
      %v1215 = vpop.permute.xlu0 %1214
      %vm1216 = vcmp.eq.s32.totalorder %v302, %v1170
      %vm1217 = vcmp.eq.s32.totalorder %v303, %v1170
      %vm1218 = vcmp.eq.s32.totalorder %v302, %v1173
      %vm1219 = vcmp.eq.s32.totalorder %v303, %v1173
      %vm1220 = vcmp.eq.s32.totalorder %v302, %v1176
      %vm1221 = vcmp.eq.s32.totalorder %v303, %v1176
      %vm1222 = vcmp.eq.s32.totalorder %v302, %v1179
      %vm1223 = vcmp.eq.s32.totalorder %v303, %v1179
      %vm1224 = vcmp.eq.s32.totalorder %v302, %v1182
      %vm1225 = vcmp.eq.s32.totalorder %v303, %v1182
      %vm1226 = vcmp.eq.s32.totalorder %v302, %v1185
      %vm1227 = vcmp.eq.s32.totalorder %v303, %v1185
      %vm1228 = vcmp.eq.s32.totalorder %v302, %v1188
      %vm1229 = vcmp.eq.s32.totalorder %v303, %v1188
      %vm1230 = vcmp.eq.s32.totalorder %v302, %v1191
      %vm1231 = vcmp.eq.s32.totalorder %v303, %v1191
      %vm1232 = vcmp.eq.s32.totalorder %v302, %v1194
      %vm1233 = vcmp.eq.s32.totalorder %v303, %v1194
      %vm1234 = vcmp.eq.s32.totalorder %v302, %v1197
      %vm1235 = vcmp.eq.s32.totalorder %v303, %v1197
      %vm1236 = vcmp.eq.s32.totalorder %v302, %v1200
      %vm1237 = vcmp.eq.s32.totalorder %v303, %v1200
      %vm1238 = vcmp.eq.s32.totalorder %v302, %v1203
      %vm1239 = vcmp.eq.s32.totalorder %v303, %v1203
      %vm1240 = vcmp.eq.s32.totalorder %v302, %v1206
      %vm1241 = vcmp.eq.s32.totalorder %v303, %v1206
      %vm1242 = vcmp.eq.s32.totalorder %v302, %v1209
      %vm1243 = vcmp.eq.s32.totalorder %v303, %v1209
      %vm1244 = vcmp.eq.s32.totalorder %v302, %v1212
      %vm1245 = vcmp.eq.s32.totalorder %v303, %v1212
      %vm1246 = vcmp.eq.s32.totalorder %v302, %v1215
      %vm1247 = vcmp.eq.s32.totalorder %v303, %v1215
      %vm1248 = vmor %vm1120, %vm1216
      %vm1249 = vmor %vm1121, %vm1217
      %vm1250 = vmor %vm1122, %vm1218
      %vm1251 = vmor %vm1123, %vm1219
      %vm1252 = vmor %vm1124, %vm1220
      %vm1253 = vmor %vm1125, %vm1221
      %vm1254 = vmor %vm1126, %vm1222
      %vm1255 = vmor %vm1127, %vm1223
      %vm1256 = vmor %vm1128, %vm1224
      %vm1257 = vmor %vm1129, %vm1225
      %vm1258 = vmor %vm1130, %vm1226
      %vm1259 = vmor %vm1131, %vm1227
      %vm1260 = vmor %vm1132, %vm1228
      %vm1261 = vmor %vm1133, %vm1229
      %vm1262 = vmor %vm1134, %vm1230
      %vm1263 = vmor %vm1135, %vm1231
      %vm1264 = vmor %vm1136, %vm1232
      %vm1265 = vmor %vm1137, %vm1233
      %vm1266 = vmor %vm1138, %vm1234
      %vm1267 = vmor %vm1139, %vm1235
      %vm1268 = vmor %vm1140, %vm1236
      %vm1269 = vmor %vm1141, %vm1237
      %vm1270 = vmor %vm1142, %vm1238
      %vm1271 = vmor %vm1143, %vm1239
      %vm1272 = vmor %vm1144, %vm1240
      %vm1273 = vmor %vm1145, %vm1241
      %vm1274 = vmor %vm1146, %vm1242
      %vm1275 = vmor %vm1147, %vm1243
      %vm1276 = vmor %vm1148, %vm1244
      %vm1277 = vmor %vm1149, %vm1245
      %vm1278 = vmor %vm1150, %vm1246
      %vm1279 = vmor %vm1151, %vm1247
      %v1280 = vsel %vm1248, 1, 0
      %v1281 = vsel %vm1249, 1, 0
      %v1282 = vsel %vm1250, 1, 0
      %v1283 = vsel %vm1251, 1, 0
      %v1284 = vsel %vm1252, 1, 0
      %v1285 = vsel %vm1253, 1, 0
      %v1286 = vsel %vm1254, 1, 0
      %v1287 = vsel %vm1255, 1, 0
      %v1288 = vsel %vm1256, 1, 0
      %v1289 = vsel %vm1257, 1, 0
      %v1290 = vsel %vm1258, 1, 0
      %v1291 = vsel %vm1259, 1, 0
      %v1292 = vsel %vm1260, 1, 0
      %v1293 = vsel %vm1261, 1, 0
      %v1294 = vsel %vm1262, 1, 0
      %v1295 = vsel %vm1263, 1, 0
      %v1296 = vsel %vm1264, 1, 0
      %v1297 = vsel %vm1265, 1, 0
      %v1298 = vsel %vm1266, 1, 0
      %v1299 = vsel %vm1267, 1, 0
      %v1300 = vsel %vm1268, 1, 0
      %v1301 = vsel %vm1269, 1, 0
      %v1302 = vsel %vm1270, 1, 0
      %v1303 = vsel %vm1271, 1, 0
      %v1304 = vsel %vm1272, 1, 0
      %v1305 = vsel %vm1273, 1, 0
      %v1306 = vsel %vm1274, 1, 0
      %v1307 = vsel %vm1275, 1, 0
      %v1308 = vsel %vm1276, 1, 0
      %v1309 = vsel %vm1277, 1, 0
      %v1310 = vsel %vm1278, 1, 0
      %v1311 = vsel %vm1279, 1, 0
      %v1312 = vcvt.s32.f32 %v1280
      %v1313 = vcvt.s32.f32 %v1281
      %v1314 = vcvt.s32.f32 %v1282
      %v1315 = vcvt.s32.f32 %v1283
      %v1316 = vcvt.s32.f32 %v1284
      %v1317 = vcvt.s32.f32 %v1285
      %v1318 = vcvt.s32.f32 %v1286
      %v1319 = vcvt.s32.f32 %v1287
      %v1320 = vcvt.s32.f32 %v1288
      %v1321 = vcvt.s32.f32 %v1289
      %v1322 = vcvt.s32.f32 %v1290
      %v1323 = vcvt.s32.f32 %v1291
      %v1324 = vcvt.s32.f32 %v1292
      %v1325 = vcvt.s32.f32 %v1293
      %v1326 = vcvt.s32.f32 %v1294
      %v1327 = vcvt.s32.f32 %v1295
      %v1328 = vcvt.s32.f32 %v1296
      %v1329 = vcvt.s32.f32 %v1297
      %v1330 = vcvt.s32.f32 %v1298
      %v1331 = vcvt.s32.f32 %v1299
      %v1332 = vcvt.s32.f32 %v1300
      %v1333 = vcvt.s32.f32 %v1301
      %v1334 = vcvt.s32.f32 %v1302
      %v1335 = vcvt.s32.f32 %v1303
      %v1336 = vcvt.s32.f32 %v1304
      %v1337 = vcvt.s32.f32 %v1305
      %v1338 = vcvt.s32.f32 %v1306
      %v1339 = vcvt.s32.f32 %v1307
      %v1340 = vcvt.s32.f32 %v1308
      %v1341 = vcvt.s32.f32 %v1309
      %v1342 = vcvt.s32.f32 %v1310
      %v1343 = vcvt.s32.f32 %v1311
      %v1344 = vpack.c.bf16 %v1314, %v1312
      %v1345 = vpack.c.bf16 %v1315, %v1313
      %v1346 = vpack.c.bf16 %v1318, %v1316
      %v1347 = vpack.c.bf16 %v1319, %v1317
      %v1348 = vpack.c.bf16 %v1322, %v1320
      %v1349 = vpack.c.bf16 %v1323, %v1321
      %v1350 = vpack.c.bf16 %v1326, %v1324
      %v1351 = vpack.c.bf16 %v1327, %v1325
      %v1352 = vpack.c.bf16 %v1330, %v1328
      %v1353 = vpack.c.bf16 %v1331, %v1329
      %v1354 = vpack.c.bf16 %v1334, %v1332
      %v1355 = vpack.c.bf16 %v1335, %v1333
      %v1356 = vpack.c.bf16 %v1338, %v1336
      %v1357 = vpack.c.bf16 %v1339, %v1337
      %v1358 = vpack.c.bf16 %v1342, %v1340
      %v1359 = vpack.c.bf16 %v1343, %v1341
      %v1360 = vld [vmem:[%s1] sm:$0xf]
      %v1361 = vld [vmem:[%s1 + $0x4] sm:$0xf]
      %v1362 = vld [vmem:[%s1 + $0x8] sm:$0xf]
      %v1363 = vld [vmem:[%s1 + $0xc] sm:$0xf]
      %v1364 = vld [vmem:[%s1 + $0x10] sm:$0xf]
      %v1365 = vld [vmem:[%s1 + $0x14] sm:$0xf]
      %v1366 = vld [vmem:[%s1 + $0x18] sm:$0xf]
      %v1367 = vld [vmem:[%s1 + $0x1c] sm:$0xf]
      %v1368 = vld [vmem:[%s1 + $0x20] sm:$0xf]
      %v1369 = vld [vmem:[%s1 + $0x24] sm:$0xf]
      %v1370 = vld [vmem:[%s1 + $0x28] sm:$0xf]
      %v1371 = vld [vmem:[%s1 + $0x2c] sm:$0xf]
      %v1372 = vld [vmem:[%s1 + $0x30] sm:$0xf]
      %v1373 = vld [vmem:[%s1 + $0x34] sm:$0xf]
      %v1374 = vld [vmem:[%s1 + $0x38] sm:$0xf]
      %v1375 = vld [vmem:[%s1 + $0x3c] sm:$0xf]
      %v1376 = vld [vmem:[%s1 + $0x40] sm:$0xf]
      %v1377 = vld [vmem:[%s1 + $0x44] sm:$0xf]
      %v1378 = vld [vmem:[%s1 + $0x48] sm:$0xf]
      %v1379 = vld [vmem:[%s1 + $0x4c] sm:$0xf]
      %v1380 = vld [vmem:[%s1 + $0x50] sm:$0xf]
      %v1381 = vld [vmem:[%s1 + $0x54] sm:$0xf]
      %v1382 = vld [vmem:[%s1 + $0x58] sm:$0xf]
      %v1383 = vld [vmem:[%s1 + $0x5c] sm:$0xf]
      %v1384 = vld [vmem:[%s1 + $0x60] sm:$0xf]
      %v1385 = vld [vmem:[%s1 + $0x64] sm:$0xf]
      %v1386 = vld [vmem:[%s1 + $0x68] sm:$0xf]
      %v1387 = vld [vmem:[%s1 + $0x6c] sm:$0xf]
      %v1388 = vld [vmem:[%s1 + $0x70] sm:$0xf]
      %v1389 = vld [vmem:[%s1 + $0x74] sm:$0xf]
      %v1390 = vld [vmem:[%s1 + $0x78] sm:$0xf]
      %v1391 = vld [vmem:[%s1 + $0x7c] sm:$0xf]
      %v1392 = vld [vmem:[%s2] sm:$0x1]
      %v1394 = vlaneseq
      %v1395 = vshrl.u32 %v1394, 7
      %v1396 = vsub.s32 0, %v1395
      %v1397 = vrot.slane %v1392, %v1396
      %v1431 = vunpack.c.l.b16 %v1360
      %v1432 = vunpack.c.l.b16 %v1361
      %v1433 = vunpack.c.l.b16 %v1362
      %v1434 = vunpack.c.l.b16 %v1363
      %v1435 = vunpack.c.l.b16 %v1364
      %v1436 = vunpack.c.l.b16 %v1365
      %v1437 = vunpack.c.l.b16 %v1366
      %v1438 = vunpack.c.l.b16 %v1367
      %v1439 = vunpack.c.l.b16 %v1368
      %v1440 = vunpack.c.l.b16 %v1369
      %v1441 = vunpack.c.l.b16 %v1370
      %v1442 = vunpack.c.l.b16 %v1371
      %v1443 = vunpack.c.l.b16 %v1372
      %v1444 = vunpack.c.l.b16 %v1373
      %v1445 = vunpack.c.l.b16 %v1374
      %v1446 = vunpack.c.l.b16 %v1375
      %v1447 = vunpack.c.l.b16 %v1376
      %v1448 = vunpack.c.l.b16 %v1377
      %v1449 = vunpack.c.l.b16 %v1378
      %v1450 = vunpack.c.l.b16 %v1379
      %v1451 = vunpack.c.l.b16 %v1380
      %v1452 = vunpack.c.l.b16 %v1381
      %v1453 = vunpack.c.l.b16 %v1382
      %v1454 = vunpack.c.l.b16 %v1383
      %v1455 = vunpack.c.l.b16 %v1384
      %v1456 = vunpack.c.l.b16 %v1385
      %v1457 = vunpack.c.l.b16 %v1386
      %v1458 = vunpack.c.l.b16 %v1387
      %v1459 = vunpack.c.l.b16 %v1388
      %v1460 = vunpack.c.l.b16 %v1389
      %v1461 = vunpack.c.l.b16 %v1390
      %v1462 = vunpack.c.l.b16 %v1391
      %v1463 = vpack.c.b16 %v1432, %v1431
      %v1464 = vpack.c.b16 %v1434, %v1433
      %v1465 = vpack.c.b16 %v1436, %v1435
      %v1466 = vpack.c.b16 %v1438, %v1437
      %v1467 = vpack.c.b16 %v1440, %v1439
      %v1468 = vpack.c.b16 %v1442, %v1441
      %v1469 = vpack.c.b16 %v1444, %v1443
      %v1470 = vpack.c.b16 %v1446, %v1445
      %v1471 = vpack.c.b16 %v1448, %v1447
      %v1472 = vpack.c.b16 %v1450, %v1449
      %v1473 = vpack.c.b16 %v1452, %v1451
      %v1474 = vpack.c.b16 %v1454, %v1453
      %v1475 = vpack.c.b16 %v1456, %v1455
      %v1476 = vpack.c.b16 %v1458, %v1457
      %v1477 = vpack.c.b16 %v1460, %v1459
      %v1478 = vpack.c.b16 %v1462, %v1461
      %1495 = vmatprep.subr.bf16.mxu0 0
      %1496 = vmatpush1.bf16.msra.mxu0 %v1463
      %1497 = vmatprep.subr.bf16.mxu0 0
      %1498 = vmatpush1.bf16.msra.mxu0 %v1464
      %1499 = vmatprep.subr.bf16.mxu0 0
      %1500 = vmatpush1.bf16.msra.mxu0 %v1465
      %1501 = vmatprep.subr.bf16.mxu0 0
      %1502 = vmatpush1.bf16.msra.mxu0 %v1466
      %1503 = vmatprep.subr.bf16.mxu0 0
      %1504 = vmatpush1.bf16.msra.mxu0 %v1467
      %1505 = vmatprep.subr.bf16.mxu0 0
      %1506 = vmatpush1.bf16.msra.mxu0 %v1468
      %1507 = vmatprep.subr.bf16.mxu0 0
      %1508 = vmatpush1.bf16.msra.mxu0 %v1469
      %1509 = vmatprep.subr.bf16.mxu0 0
      %1510 = vmatpush1.bf16.msra.mxu0 %v1470
      %1511 = vmatprep.subr.bf16.mxu0 0
      %1512 = vmatpush1.bf16.msra.mxu0 %v1471
      %1513 = vmatprep.subr.bf16.mxu0 0
      %1514 = vmatpush1.bf16.msra.mxu0 %v1472
      %1515 = vmatprep.subr.bf16.mxu0 0
      %1516 = vmatpush1.bf16.msra.mxu0 %v1473
      %1517 = vmatprep.subr.bf16.mxu0 0
      %1518 = vmatpush1.bf16.msra.mxu0 %v1474
      %1519 = vmatprep.subr.bf16.mxu0 0
      %1520 = vmatpush1.bf16.msra.mxu0 %v1475
      %1521 = vmatprep.subr.bf16.mxu0 0
      %1522 = vmatpush1.bf16.msra.mxu0 %v1476
      %1523 = vmatprep.subr.bf16.mxu0 0
      %1524 = vmatpush1.bf16.msra.mxu0 %v1477
      %1525 = vmatprep.subr.bf16.mxu0 0
      %1526 = vmatpush1.bf16.msra.mxu0 %v1478
      %1527 = vmatprep.mubr.bf16.mxu0 %v1345
      %1528 = vmatmul.mubr.bf16.gmra.mrb[0].mxu0 %v1344
      %v1529 = vpop.f32.mrb[0].mxu0
      %v1530 = vadd.f32 %v1397, %v1529
      %v1531 = vpop.f32.mrb[0].mxu0
      %v1532 = vpop.f32.mrb[0].mxu0
      %v1533 = vadd.f32 %v1397, %v1532
      %v1534 = vpop.f32.mrb[0].mxu0
      %1535 = vmatprep.mubr.bf16.mxu0 %v1347
      %1536 = vmatmul.mubr.bf16.gmra.mrb[0].mxu0 %v1346
      %v1537 = vpop.f32.mrb[0].mxu0
      %v1538 = vadd.f32 %v1397, %v1537
      %v1539 = vpop.f32.mrb[0].mxu0
      %v1540 = vpop.f32.mrb[0].mxu0
      %v1541 = vadd.f32 %v1397, %v1540
      %v1542 = vpop.f32.mrb[0].mxu0
      %1543 = vmatprep.mubr.bf16.mxu0 %v1349
      %1544 = vmatmul.mubr.bf16.gmra.mrb[0].mxu0 %v1348
      %v1545 = vpop.f32.mrb[0].mxu0
      %v1546 = vadd.f32 %v1397, %v1545
      %v1547 = vpop.f32.mrb[0].mxu0
      %v1548 = vpop.f32.mrb[0].mxu0
      %v1549 = vadd.f32 %v1397, %v1548
      %v1550 = vpop.f32.mrb[0].mxu0
      %1551 = vmatprep.mubr.bf16.mxu0 %v1351
      %1552 = vmatmul.mubr.bf16.gmra.mrb[0].mxu0 %v1350
      %v1553 = vpop.f32.mrb[0].mxu0
      %v1554 = vadd.f32 %v1397, %v1553
      %v1555 = vpop.f32.mrb[0].mxu0
      %v1556 = vpop.f32.mrb[0].mxu0
      %v1557 = vadd.f32 %v1397, %v1556
      %v1558 = vpop.f32.mrb[0].mxu0
      %1559 = vmatprep.mubr.bf16.mxu0 %v1353
      %1560 = vmatmul.mubr.bf16.gmra.mrb[0].mxu0 %v1352
      %v1561 = vpop.f32.mrb[0].mxu0
      %v1562 = vadd.f32 %v1397, %v1561
      %v1563 = vpop.f32.mrb[0].mxu0
      %v1564 = vpop.f32.mrb[0].mxu0
      %v1565 = vadd.f32 %v1397, %v1564
      %v1566 = vpop.f32.mrb[0].mxu0
      %1567 = vmatprep.mubr.bf16.mxu0 %v1355
      %1568 = vmatmul.mubr.bf16.gmra.mrb[0].mxu0 %v1354
      %v1569 = vpop.f32.mrb[0].mxu0
      %v1570 = vadd.f32 %v1397, %v1569
      %v1571 = vpop.f32.mrb[0].mxu0
      %v1572 = vpop.f32.mrb[0].mxu0
      %v1573 = vadd.f32 %v1397, %v1572
      %v1574 = vpop.f32.mrb[0].mxu0
      %1575 = vmatprep.mubr.bf16.mxu0 %v1357
      %1576 = vmatmul.mubr.bf16.gmra.mrb[0].mxu0 %v1356
      %v1577 = vpop.f32.mrb[0].mxu0
      %v1578 = vadd.f32 %v1397, %v1577
      %v1579 = vpop.f32.mrb[0].mxu0
      %v1580 = vpop.f32.mrb[0].mxu0
      %v1581 = vadd.f32 %v1397, %v1580
      %v1582 = vpop.f32.mrb[0].mxu0
      %1583 = vmatprep.mubr.bf16.mxu0 %v1359
      %1584 = vmatmul.mubr.bf16.gmra.mrb[0].mxu0 %v1358
      %v1585 = vpop.f32.mrb[0].mxu0
      %v1586 = vadd.f32 %v1397, %v1585
      %v1587 = vpop.f32.mrb[0].mxu0
      %v1588 = vpop.f32.mrb[0].mxu0
      %v1589 = vadd.f32 %v1397, %v1588
      %v1590 = vpop.f32.mrb[0].mxu0
      %1591 = vdwg.mxu0
      %v1592 = vmax.f32 %v1530, 0.0
      %v1593 = vmax.f32 %v1533, 0.0
      %v1594 = vmax.f32 %v1538, 0.0
      %v1595 = vmax.f32 %v1541, 0.0
      %v1596 = vmax.f32 %v1546, 0.0
      %v1597 = vmax.f32 %v1549, 0.0
      %v1598 = vmax.f32 %v1554, 0.0
      %v1599 = vmax.f32 %v1557, 0.0
      %v1600 = vmax.f32 %v1562, 0.0
      %v1601 = vmax.f32 %v1565, 0.0
      %v1602 = vmax.f32 %v1570, 0.0
      %v1603 = vmax.f32 %v1573, 0.0
      %v1604 = vmax.f32 %v1578, 0.0
      %v1605 = vmax.f32 %v1581, 0.0
      %v1606 = vmax.f32 %v1586, 0.0
      %v1607 = vmax.f32 %v1589, 0.0
      %v1608 = vpack.c.bf16 %v1593, %v1592
      %v1609 = vpack.c.bf16 %v1595, %v1594
      %v1610 = vpack.c.bf16 %v1597, %v1596
      %v1611 = vpack.c.bf16 %v1599, %v1598
      %v1612 = vpack.c.bf16 %v1601, %v1600
      %v1613 = vpack.c.bf16 %v1603, %v1602
      %v1614 = vpack.c.bf16 %v1605, %v1604
      %v1615 = vpack.c.bf16 %v1607, %v1606
      %v1616 = vld [vmem:[%s3] sm:$0xf]
      %v1617 = vld [vmem:[%s3 + $0x4] sm:$0xf]
      %v1618 = vld [vmem:[%s3 + $0x8] sm:$0xf]
      %v1619 = vld [vmem:[%s3 + $0xc] sm:$0xf]
      %v1620 = vld [vmem:[%s4] sm:$0x1]
      %v1622 = vlaneseq
      %v1623 = vshrl.u32 %v1622, 7
      %v1624 = vsub.s32 0, %v1623
      %v1625 = vrot.slane %v1620, %v1624
      %v1631 = vunpack.c.l.b16 %v1616
      %v1632 = vunpack.c.l.b16 %v1617
      %v1633 = vunpack.c.l.b16 %v1618
      %v1634 = vunpack.c.l.b16 %v1619
      %v1635 = vpack.c.b16 %v1632, %v1631
      %v1636 = vpack.c.b16 %v1634, %v1633
      %vm1639 = vcmask 261120
      %v1641 = vsel %vm1639, %v1608, 0
      %v1644 = vsel %vm1639, %v1609, 0
      %v1647 = vsel %vm1639, %v1610, 0
      %v1650 = vsel %vm1639, %v1611, 0
      %v1653 = vsel %vm1639, %v1612, 0
      %v1656 = vsel %vm1639, %v1613, 0
      %v1659 = vsel %vm1639, %v1614, 0
      %v1662 = vsel %vm1639, %v1615, 0
      %1664 = vmatprep.subr.bf16.mxu0 0
      %1665 = vmatpush1.bf16.msra.mxu0 %v1635
      %1666 = vmatprep.subr.bf16.mxu0 0
      %1667 = vmatpush1.bf16.msra.mxu0 %v1636
      %1668 = vmatprep.subr.bf16.mxu0 0
      %1669 = vmatpush1.bf16.msra.mxu0 0
      %1670 = vmatprep.subr.bf16.mxu0 0
      %1671 = vmatpush1.bf16.msra.mxu0 0
      %1672 = vmatprep.subr.bf16.mxu0 0
      %1673 = vmatpush1.bf16.msra.mxu0 0
      %1674 = vmatprep.subr.bf16.mxu0 0
      %1675 = vmatpush1.bf16.msra.mxu0 0
      %1676 = vmatprep.subr.bf16.mxu0 0
      %1677 = vmatpush1.bf16.msra.mxu0 0
      %1678 = vmatprep.subr.bf16.mxu0 0
      %1679 = vmatpush1.bf16.msra.mxu0 0
      %1680 = vmatprep.subr.bf16.mxu0 0
      %1681 = vmatpush1.bf16.msra.mxu0 0
      %1682 = vmatprep.subr.bf16.mxu0 0
      %1683 = vmatpush1.bf16.msra.mxu0 0
      %1684 = vmatprep.subr.bf16.mxu0 0
      %1685 = vmatpush1.bf16.msra.mxu0 0
      %1686 = vmatprep.subr.bf16.mxu0 0
      %1687 = vmatpush1.bf16.msra.mxu0 0
      %1688 = vmatprep.subr.bf16.mxu0 0
      %1689 = vmatpush1.bf16.msra.mxu0 0
      %1690 = vmatprep.subr.bf16.mxu0 0
      %1691 = vmatpush1.bf16.msra.mxu0 0
      %1692 = vmatprep.subr.bf16.mxu0 0
      %1693 = vmatpush1.bf16.msra.mxu0 0
      %1694 = vmatprep.subr.bf16.mxu0 0
      %1695 = vmatpush1.bf16.msra.mxu0 0
      %1696 = vmatprep.mubr.bf16.mxu0 0
      %1697 = vmatmul.mubr.bf16.gmra.mrb[0].mxu0 %v1641
      %v1698 = vpop.f32.mrb[0].mxu0
      %v1699 = vadd.f32 %v1625, %v1698
      %v1700 = vpop.f32.mrb[0].mxu0
      %v1701 = vpop.f32.mrb[0].mxu0
      %v1702 = vadd.f32 %v1625, %v1701
      %v1703 = vpop.f32.mrb[0].mxu0
      %1704 = vmatprep.mubr.bf16.mxu0 0
      %1705 = vmatmul.mubr.bf16.gmra.mrb[0].mxu0 %v1644
      %v1706 = vpop.f32.mrb[0].mxu0
      %v1707 = vadd.f32 %v1625, %v1706
      %v1708 = vpop.f32.mrb[0].mxu0
      %v1709 = vpop.f32.mrb[0].mxu0
      %v1710 = vadd.f32 %v1625, %v1709
      %v1711 = vpop.f32.mrb[0].mxu0
      %1712 = vmatprep.mubr.bf16.mxu0 0
      %1713 = vmatmul.mubr.bf16.gmra.mrb[0].mxu0 %v1647
      %v1714 = vpop.f32.mrb[0].mxu0
      %v1715 = vadd.f32 %v1625, %v1714
      %v1716 = vpop.f32.mrb[0].mxu0
      %v1717 = vpop.f32.mrb[0].mxu0
      %v1718 = vadd.f32 %v1625, %v1717
      %v1719 = vpop.f32.mrb[0].mxu0
      %1720 = vmatprep.mubr.bf16.mxu0 0
      %1721 = vmatmul.mubr.bf16.gmra.mrb[0].mxu0 %v1650
      %v1722 = vpop.f32.mrb[0].mxu0
      %v1723 = vadd.f32 %v1625, %v1722
      %v1724 = vpop.f32.mrb[0].mxu0
      %v1725 = vpop.f32.mrb[0].mxu0
      %v1726 = vadd.f32 %v1625, %v1725
      %v1727 = vpop.f32.mrb[0].mxu0
      %1728 = vmatprep.mubr.bf16.mxu0 0
      %1729 = vmatmul.mubr.bf16.gmra.mrb[0].mxu0 %v1653
      %v1730 = vpop.f32.mrb[0].mxu0
      %v1731 = vadd.f32 %v1625, %v1730
      %v1732 = vpop.f32.mrb[0].mxu0
      %v1733 = vpop.f32.mrb[0].mxu0
      %v1734 = vadd.f32 %v1625, %v1733
      %v1735 = vpop.f32.mrb[0].mxu0
      %1736 = vmatprep.mubr.bf16.mxu0 0
      %1737 = vmatmul.mubr.bf16.gmra.mrb[0].mxu0 %v1656
      %v1738 = vpop.f32.mrb[0].mxu0
      %v1739 = vadd.f32 %v1625, %v1738
      %v1740 = vpop.f32.mrb[0].mxu0
      %v1741 = vpop.f32.mrb[0].mxu0
      %v1742 = vadd.f32 %v1625, %v1741
      %v1743 = vpop.f32.mrb[0].mxu0
      %1744 = vmatprep.mubr.bf16.mxu0 0
      %1745 = vmatmul.mubr.bf16.gmra.mrb[0].mxu0 %v1659
      %v1746 = vpop.f32.mrb[0].mxu0
      %v1747 = vadd.f32 %v1625, %v1746
      %v1748 = vpop.f32.mrb[0].mxu0
      %v1749 = vpop.f32.mrb[0].mxu0
      %v1750 = vadd.f32 %v1625, %v1749
      %v1751 = vpop.f32.mrb[0].mxu0
      %1752 = vmatprep.mubr.bf16.mxu0 0
      %1753 = vmatmul.mubr.bf16.gmra.mrb[0].mxu0 %v1662
      %v1754 = vpop.f32.mrb[0].mxu0
      %v1755 = vadd.f32 %v1625, %v1754
      %v1756 = vpop.f32.mrb[0].mxu0
      %v1757 = vpop.f32.mrb[0].mxu0
      %v1758 = vadd.f32 %v1625, %v1757
      %v1759 = vpop.f32.mrb[0].mxu0
      %1760 = vdwg.mxu0
      %v1761 = vmax.f32 %v1699, 0.0
      %v1762 = vmax.f32 %v1702, 0.0
      %v1763 = vmax.f32 %v1707, 0.0
      %v1764 = vmax.f32 %v1710, 0.0
      %v1765 = vmax.f32 %v1715, 0.0
      %v1766 = vmax.f32 %v1718, 0.0
      %v1767 = vmax.f32 %v1723, 0.0
      %v1768 = vmax.f32 %v1726, 0.0
      %v1769 = vmax.f32 %v1731, 0.0
      %v1770 = vmax.f32 %v1734, 0.0
      %v1771 = vmax.f32 %v1739, 0.0
      %v1772 = vmax.f32 %v1742, 0.0
      %v1773 = vmax.f32 %v1747, 0.0
      %v1774 = vmax.f32 %v1750, 0.0
      %v1775 = vmax.f32 %v1755, 0.0
      %v1776 = vmax.f32 %v1758, 0.0
      %v1777 = vpack.c.bf16 %v1762, %v1761
      %v1778 = vpack.c.bf16 %v1764, %v1763
      %v1779 = vpack.c.bf16 %v1766, %v1765
      %v1780 = vpack.c.bf16 %v1768, %v1767
      %v1781 = vpack.c.bf16 %v1770, %v1769
      %v1782 = vpack.c.bf16 %v1772, %v1771
      %v1783 = vpack.c.bf16 %v1774, %v1773
      %v1784 = vpack.c.bf16 %v1776, %v1775
      %v1785 = vld [vmem:[%s5] sm:$0xff]
      %v1786 = vld [vmem:[%s5 + $0x8] sm:$0xff]
      %v1787 = vld [vmem:[%s5 + $0x10] sm:$0xff]
      %v1788 = vld [vmem:[%s5 + $0x18] sm:$0xff]
      %v1789 = vld [vmem:[%s6] sm:$0x3]
      %v1791 = vlaneseq
      %v1792 = vshrl.u32 %v1791, 7
      %v1793 = vsub.s32 0, %v1792
      %v1794 = vrot.slane %v1789, %v1793
      %v1795 = vlaneseq
      %v1796 = vshrl.u32 %v1795, 7
      %v1797 = vsub.s32 1, %v1796
      %v1798 = vrot.slane %v1789, %v1797
      %v1805 = vunpack.c.l.b16 %v1785
      %v1806 = vunpack.c.h.b16 %v1785
      %v1807 = vunpack.c.l.b16 %v1786
      %v1808 = vunpack.c.h.b16 %v1786
      %v1809 = vunpack.c.l.b16 %v1787
      %v1810 = vunpack.c.h.b16 %v1787
      %v1811 = vunpack.c.l.b16 %v1788
      %v1812 = vunpack.c.h.b16 %v1788
      %v1813 = vpack.c.b16 %v1807, %v1805
      %v1814 = vpack.c.b16 %v1808, %v1806
      %v1815 = vpack.c.b16 %v1811, %v1809
      %v1816 = vpack.c.b16 %v1812, %v1810
      %v1822 = vsel %vm1639, %v1777, 0
      %v1825 = vsel %vm1639, %v1778, 0
      %v1828 = vsel %vm1639, %v1779, 0
      %v1831 = vsel %vm1639, %v1780, 0
      %v1834 = vsel %vm1639, %v1781, 0
      %v1837 = vsel %vm1639, %v1782, 0
      %v1840 = vsel %vm1639, %v1783, 0
      %v1843 = vsel %vm1639, %v1784, 0
      %1845 = vmatprep.subr.bf16.mxu0 %v1814
      %1846 = vmatpush1.bf16.msra.mxu0 %v1813
      %1847 = vmatprep.subr.bf16.mxu0 %v1816
      %1848 = vmatpush1.bf16.msra.mxu0 %v1815
      %1849 = vmatprep.subr.bf16.mxu0 0
      %1850 = vmatpush1.bf16.msra.mxu0 0
      %1851 = vmatprep.subr.bf16.mxu0 0
      %1852 = vmatpush1.bf16.msra.mxu0 0
      %1853 = vmatprep.subr.bf16.mxu0 0
      %1854 = vmatpush1.bf16.msra.mxu0 0
      %1855 = vmatprep.subr.bf16.mxu0 0
      %1856 = vmatpush1.bf16.msra.mxu0 0
      %1857 = vmatprep.subr.bf16.mxu0 0
      %1858 = vmatpush1.bf16.msra.mxu0 0
      %1859 = vmatprep.subr.bf16.mxu0 0
      %1860 = vmatpush1.bf16.msra.mxu0 0
      %1861 = vmatprep.subr.bf16.mxu0 0
      %1862 = vmatpush1.bf16.msra.mxu0 0
      %1863 = vmatprep.subr.bf16.mxu0 0
      %1864 = vmatpush1.bf16.msra.mxu0 0
      %1865 = vmatprep.subr.bf16.mxu0 0
      %1866 = vmatpush1.bf16.msra.mxu0 0
      %1867 = vmatprep.subr.bf16.mxu0 0
      %1868 = vmatpush1.bf16.msra.mxu0 0
      %1869 = vmatprep.subr.bf16.mxu0 0
      %1870 = vmatpush1.bf16.msra.mxu0 0
      %1871 = vmatprep.subr.bf16.mxu0 0
      %1872 = vmatpush1.bf16.msra.mxu0 0
      %1873 = vmatprep.subr.bf16.mxu0 0
      %1874 = vmatpush1.bf16.msra.mxu0 0
      %1875 = vmatprep.subr.bf16.mxu0 0
      %1876 = vmatpush1.bf16.msra.mxu0 0
      %1877 = vmatprep.mubr.bf16.mxu0 0
      %1878 = vmatmul.mubr.bf16.gmra.mrb[0].mxu0 %v1822
      %v1879 = vpop.f32.mrb[0].mxu0
      %v1880 = vadd.f32 %v1794, %v1879
      %v1881 = vpop.f32.mrb[0].mxu0
      %v1882 = vadd.f32 %v1798, %v1881
      %v1883 = vpop.f32.mrb[0].mxu0
      %v1884 = vadd.f32 %v1794, %v1883
      %v1885 = vpop.f32.mrb[0].mxu0
      %v1886 = vadd.f32 %v1798, %v1885
      %1887 = vmatprep.mubr.bf16.mxu0 0
      %1888 = vmatmul.mubr.bf16.gmra.mrb[0].mxu0 %v1825
      %v1889 = vpop.f32.mrb[0].mxu0
      %v1890 = vadd.f32 %v1794, %v1889
      %v1891 = vpop.f32.mrb[0].mxu0
      %v1892 = vadd.f32 %v1798, %v1891
      %v1893 = vpop.f32.mrb[0].mxu0
      %v1894 = vadd.f32 %v1794, %v1893
      %v1895 = vpop.f32.mrb[0].mxu0
      %v1896 = vadd.f32 %v1798, %v1895
      %1897 = vmatprep.mubr.bf16.mxu0 0
      %1898 = vmatmul.mubr.bf16.gmra.mrb[0].mxu0 %v1828
      %v1899 = vpop.f32.mrb[0].mxu0
      %v1900 = vadd.f32 %v1794, %v1899
      %v1901 = vpop.f32.mrb[0].mxu0
      %v1902 = vadd.f32 %v1798, %v1901
      %v1903 = vpop.f32.mrb[0].mxu0
      %v1904 = vadd.f32 %v1794, %v1903
      %v1905 = vpop.f32.mrb[0].mxu0
      %v1906 = vadd.f32 %v1798, %v1905
      %1907 = vmatprep.mubr.bf16.mxu0 0
      %1908 = vmatmul.mubr.bf16.gmra.mrb[0].mxu0 %v1831
      %v1909 = vpop.f32.mrb[0].mxu0
      %v1910 = vadd.f32 %v1794, %v1909
      %v1911 = vpop.f32.mrb[0].mxu0
      %v1912 = vadd.f32 %v1798, %v1911
      %v1913 = vpop.f32.mrb[0].mxu0
      %v1914 = vadd.f32 %v1794, %v1913
      %v1915 = vpop.f32.mrb[0].mxu0
      %v1916 = vadd.f32 %v1798, %v1915
      %1917 = vmatprep.mubr.bf16.mxu0 0
      %1918 = vmatmul.mubr.bf16.gmra.mrb[0].mxu0 %v1834
      %v1919 = vpop.f32.mrb[0].mxu0
      %v1920 = vadd.f32 %v1794, %v1919
      %v1921 = vpop.f32.mrb[0].mxu0
      %v1922 = vadd.f32 %v1798, %v1921
      %v1923 = vpop.f32.mrb[0].mxu0
      %v1924 = vadd.f32 %v1794, %v1923
      %v1925 = vpop.f32.mrb[0].mxu0
      %v1926 = vadd.f32 %v1798, %v1925
      %1927 = vmatprep.mubr.bf16.mxu0 0
      %1928 = vmatmul.mubr.bf16.gmra.mrb[0].mxu0 %v1837
      %v1929 = vpop.f32.mrb[0].mxu0
      %v1930 = vadd.f32 %v1794, %v1929
      %v1931 = vpop.f32.mrb[0].mxu0
      %v1932 = vadd.f32 %v1798, %v1931
      %v1933 = vpop.f32.mrb[0].mxu0
      %v1934 = vadd.f32 %v1794, %v1933
      %v1935 = vpop.f32.mrb[0].mxu0
      %v1936 = vadd.f32 %v1798, %v1935
      %1937 = vmatprep.mubr.bf16.mxu0 0
      %1938 = vmatmul.mubr.bf16.gmra.mrb[0].mxu0 %v1840
      %v1939 = vpop.f32.mrb[0].mxu0
      %v1940 = vadd.f32 %v1794, %v1939
      %v1941 = vpop.f32.mrb[0].mxu0
      %v1942 = vadd.f32 %v1798, %v1941
      %v1943 = vpop.f32.mrb[0].mxu0
      %v1944 = vadd.f32 %v1794, %v1943
      %v1945 = vpop.f32.mrb[0].mxu0
      %v1946 = vadd.f32 %v1798, %v1945
      %1947 = vmatprep.mubr.bf16.mxu0 0
      %1948 = vmatmul.mubr.bf16.gmra.mrb[0].mxu0 %v1843
      %v1949 = vpop.f32.mrb[0].mxu0
      %v1950 = vadd.f32 %v1794, %v1949
      %v1951 = vpop.f32.mrb[0].mxu0
      %v1952 = vadd.f32 %v1798, %v1951
      %v1953 = vpop.f32.mrb[0].mxu0
      %v1954 = vadd.f32 %v1794, %v1953
      %v1955 = vpop.f32.mrb[0].mxu0
      %v1956 = vadd.f32 %v1798, %v1955
      %1957 = vdwg.mxu0
      %1958 = vst [vmem:[%s282] sm:$0xff] %v1880
      %1959 = vst [vmem:[%s282 + $0x8] sm:$0xff] %v1882
      %1960 = vst [vmem:[%s282 + $0x10] sm:$0xff] %v1884
      %1961 = vst [vmem:[%s282 + $0x18] sm:$0xff] %v1886
      %1962 = vst [vmem:[%s282 + $0x20] sm:$0xff] %v1890
      %1963 = vst [vmem:[%s282 + $0x28] sm:$0xff] %v1892
      %1964 = vst [vmem:[%s282 + $0x30] sm:$0xff] %v1894
      %1965 = vst [vmem:[%s282 + $0x38] sm:$0xff] %v1896
      %1966 = vst [vmem:[%s282 + $0x40] sm:$0xff] %v1900
      %1967 = vst [vmem:[%s282 + $0x48] sm:$0xff] %v1902
      %1968 = vst [vmem:[%s282 + $0x50] sm:$0xff] %v1904
      %1969 = vst [vmem:[%s282 + $0x58] sm:$0xff] %v1906
      %1970 = vst [vmem:[%s282 + $0x60] sm:$0xff] %v1910
      %1971 = vst [vmem:[%s282 + $0x68] sm:$0xff] %v1912
      %1972 = vst [vmem:[%s282 + $0x70] sm:$0xff] %v1914
      %1973 = vst [vmem:[%s282 + $0x78] sm:$0xff] %v1916
      %1974 = vst [vmem:[%s282 + $0x80] sm:$0xff] %v1920
      %1975 = vst [vmem:[%s282 + $0x88] sm:$0xff] %v1922
      %1976 = vst [vmem:[%s282 + $0x90] sm:$0xff] %v1924
      %1977 = vst [vmem:[%s282 + $0x98] sm:$0xff] %v1926
      %1978 = vst [vmem:[%s282 + $0xa0] sm:$0xff] %v1930
      %1979 = vst [vmem:[%s282 + $0xa8] sm:$0xff] %v1932
      %1980 = vst [vmem:[%s282 + $0xb0] sm:$0xff] %v1934
      %1981 = vst [vmem:[%s282 + $0xb8] sm:$0xff] %v1936
      %1982 = vst [vmem:[%s282 + $0xc0] sm:$0xff] %v1940
      %1983 = vst [vmem:[%s282 + $0xc8] sm:$0xff] %v1942
      %1984 = vst [vmem:[%s282 + $0xd0] sm:$0xff] %v1944
      %1985 = vst [vmem:[%s282 + $0xd8] sm:$0xff] %v1946
      %1986 = vst [vmem:[%s282 + $0xe0] sm:$0xff] %v1950
      %1987 = vst [vmem:[%s282 + $0xe8] sm:$0xff] %v1952
      %1988 = vst [vmem:[%s282 + $0xf0] sm:$0xff] %v1954
      %1989 = vst [vmem:[%s282 + $0xf8] sm:$0xff] %v1956
      %s1990 = smul.u32 16, %s18
      %p1991 = scmp.lt.s32.totalorder %s1990, 31
      %s1992 = scalar_select %p1991, %s1990, 31
      %s1993 = smul.addr %s1992, 2
      %s1994 = smul.addr %s1993, 8
      %s1995 = scalar_lea.vmem %s7, %s1994
      // Predicated region
      $region49: #{predict_past_tense.1} parent=47 // pred_check
        %p1996 = pneg %p188
      $region50: #{predict_past_tense.1} parent=47 // pred_check_branch
        %1998 = sbr.rel (%p1996) target = $region52
      $region51: #{predict_past_tense.1} parent=47 // pred_region
        %s1999 = smul.u32 16, %s18
      $region52: #{predict_past_tense.1} parent=47 // pred_fallthru
        _
    $region48: #{predict_past_tense.1} parent=5 // pred_fallthru
      _
    %p2000 = scmp.le.s32.totalorder 2, %s13
    // Predicated region
    $region53: #{predict_past_tense.1} parent=5 // pred_check
      %p2001 = pneg %p2000
    $region54: #{predict_past_tense.1} parent=5 // pred_check_branch
      %2003 = sbr.rel (%p2001) target = $region56
    $region55: #{predict_past_tense.1} parent=5 // pred_region
      %s2004 = ssub.s32 %s13, 2
      // Predicated region
      $region57: #{predict_past_tense.1} parent=55 // pred_check
        %p2005 = pneg %p194
      $region58: #{predict_past_tense.1} parent=55 // pred_check_branch
        %2007 = sbr.rel (%p2005) target = $region60
      $region59: #{predict_past_tense.1} parent=55 // pred_region
        %s2008 = smul.u32 16, %s19
        %p2009 = scmp.lt.s32.totalorder %s2008, 31
        %s2010 = scalar_select %p2009, %s2008, 31
        %s2011 = smul.addr %s2010, 2
        %s2012 = smul.addr %s2011, 8
        %s2013 = scalar_lea.vmem %s7, %s2012
      $region60: #{predict_past_tense.1} parent=55 // pred_fallthru
        _
    $region56: #{predict_past_tense.1} parent=5 // pred_fallthru
      _
  $region6: #{predict_past_tense.1} parent=0 // loop_footer
    %s17 = sadd.s32 1, %s13
  $region7: #{predict_past_tense.1} parent=0 // loop_footer_branch
    %12 = sbr.rel target = $region3
  $region8: #{predict_past_tense.1} parent=0 // loop_exit
    _

</llo_original>
